<compile_context>
chip_gen: v7x
topology: tpu7x:2x2x1
jax: 0.10.0
libtpu: 0.0.40
codegen_flags: <defaults>
</compile_context>

<pallas_src>
import math

import jax
import jax.numpy as jnp
from jax.experimental import pallas as pl
from jax.experimental.pallas import tpu as pltpu

# ----------------------------- configuration --------------------------------
HID = 32          # hid_dim (small-shape stand-in for 256)
N_HEADS = 4
HEAD_DIM = HID // N_HEADS
PF_DIM = 64       # pf_dim
OUT_DIM = 128     # output_dim (vocab size)
N_LAYERS = 2
MAX_LEN = 100
TRG_PAD_IDX = 1
B = 2
T = 8
BT = B * T
LN_EPS = 1e-5


# ------------------------------ kernel ---------------------------------------
def _layernorm(x, g, b):
    mean = jnp.mean(x, axis=-1, keepdims=True)
    var = jnp.mean((x - mean) ** 2, axis=-1, keepdims=True)
    return (x - mean) * jax.lax.rsqrt(var + LN_EPS) * g + b


def fused_decoder_kernel(x_ref, madd_ref,
                         wqkv_ref, bqkv_ref, wo_ref, bo_ref,
                         g1_ref, be1_ref, w1_ref, b1_ref, w2_ref, b2_ref,
                         g2_ref, be2_ref, wf_ref, bf_ref,
                         out_ref, attn_ref):
    """Fused: one DecoderLayer (self-attn + FFN) + final vocab fc, whole batch."""
    x = x_ref[...]                                   # [BT, HID]
    madd = madd_ref[...]                             # [BT, BT] additive mask
    inv_scale = jnp.float32(1.0 / math.sqrt(HEAD_DIM))

    # Single fused QKV projection for the whole batch: [BT,HID] x [HID,3*HID].
    qkv = (jnp.dot(x, wqkv_ref[...], preferred_element_type=jnp.float32)
           + bqkv_ref[...])                          # [BT, 3*HID]

    ctx_heads, attn_heads = [], []
    for h in range(N_HEADS):                         # static unrolled; lane slices
        qh = qkv[:, h * HEAD_DIM:(h + 1) * HEAD_DIM]                     # [BT, HD]
        kh = qkv[:, HID + h * HEAD_DIM:HID + (h + 1) * HEAD_DIM]         # [BT, HD]
        vh = qkv[:, 2 * HID + h * HEAD_DIM:2 * HID + (h + 1) * HEAD_DIM]  # [BT, HD]

        # Scores across both batches at once; cross-batch / masked entries get
        # -1e10 from the additive mask and exp() to exactly 0 after the max-sub.
        e = (jnp.dot(qh, kh.T, preferred_element_type=jnp.float32) * inv_scale
             + madd)                                 # [BT, BT]
        e_max = jnp.max(e, axis=-1, keepdims=True)
        p = jnp.exp(e - e_max)
        a = p * pl.reciprocal(jnp.sum(p, axis=-1, keepdims=True), approx=True)

        ctx_heads.append(jnp.dot(a, vh, preferred_element_type=jnp.float32))
        # diagonal [T,T] blocks = per-batch attention probabilities
        attn_heads.append(jnp.concatenate(
            [a[b * T:(b + 1) * T, b * T:(b + 1) * T] for b in range(B)], axis=0))

    # Fused output projection: lane-concat heads, one matmul with full Wo.
    ctx = jnp.concatenate(ctx_heads, axis=-1)        # [BT, HID]
    att_out = (jnp.dot(ctx, wo_ref[...], preferred_element_type=jnp.float32)
               + bo_ref[...])

    # residual + LayerNorm (masked-attention norm)
    trg = _layernorm(x + att_out, g1_ref[...], be1_ref[...])

    # positionwise feed-forward
    h1 = jnp.maximum(
        jnp.dot(trg, w1_ref[...], preferred_element_type=jnp.float32) + b1_ref[...],
        0.0)
    ff = jnp.dot(h1, w2_ref[...], preferred_element_type=jnp.float32) + b2_ref[...]

    # residual + LayerNorm (ff norm)
    y = _layernorm(trg + ff, g2_ref[...], be2_ref[...])

    # final vocabulary projection (OUT_DIM = 128 -> lane-dense store)
    out_ref[...] = (jnp.dot(y, wf_ref[...], preferred_element_type=jnp.float32)
                    + bf_ref[...])
    # attention probabilities: single store in [BT, N_HEADS*T] layout
    attn_ref[...] = jnp.concatenate(attn_heads, axis=-1)


# --------------------------- pallas_call wrapper -------------------------------
def _full_spec(arr):
    nd = arr.ndim
    return pl.BlockSpec(arr.shape, lambda i, _nd=nd: (0,) * _nd)


def decoder_forward(tokens, params):
    # Additive attention mask over the folded [B*T, B*T] score matrix:
    # allowed(b, q, k) = (tokens[b, k] != pad) & (k <= q), block-diagonal in b.
    key_not_pad = (tokens != TRG_PAD_IDX).reshape(-1)                # [BT]
    row_b = jnp.arange(BT) // T
    row_t = jnp.arange(BT) % T
    allowed = ((row_b[:, None] == row_b[None, :])
               & (row_t[None, :] <= row_t[:, None])
               & key_not_pad[None, :])
    mask_add = jnp.where(allowed, 0.0, -1e10).astype(jnp.float32)    # [BT, BT]

    # embeddings: pos_emb + trg_emb * sqrt(hid_dim)   (dropout = identity)
    pos_e = params["pos_emb"][:T]                                    # [T, H]
    trg_e = jnp.take(params["trg_emb"], tokens, axis=0)              # [B, T, H]
    x2d = (pos_e[None] + trg_e * jnp.float32(math.sqrt(HID))).reshape(BT, HID)

    # Faithful to the PyTorch loop `for layer in layers: trg, attn = layer(x, mask)`:
    # every layer consumes the embeddings, so only the LAST layer's output is
    # live — execute exactly that layer (identical result, single launch).
    (wq, bq, wk, bk, wv, bv, wo, bo, g1, be1,
     w1, b1, w2, b2, g2, be2) = params["layers"][-1]

    # Fused QKV weight/bias; columns are naturally head-major:
    # [q_h0..q_h3 | k_h0..k_h3 | v_h0..v_h3]
    wqkv = jnp.concatenate([wq, wk, wv], axis=1)     # [HID, 3*HID]
    bqkv = jnp.concatenate([bq, bk, bv], axis=1)     # [1, 3*HID]

    kernel_inputs = (x2d, mask_add, wqkv, bqkv, wo, bo, g1, be1,
                     w1, b1, w2, b2, g2, be2, params["fc_w"], params["fc_b"])

    out_shape = (
        jax.ShapeDtypeStruct((BT, OUT_DIM), jnp.float32),
        jax.ShapeDtypeStruct((BT, N_HEADS * T), jnp.float32),
    )
    out_specs = (
        pl.BlockSpec((BT, OUT_DIM), lambda i: (0, 0)),
        pl.BlockSpec((BT, N_HEADS * T), lambda i: (0, 0)),
    )

    logits2d, attn_flat = pl.pallas_call(
        fused_decoder_kernel,
        grid=(1,),
        in_specs=[_full_spec(a) for a in kernel_inputs],
        out_specs=out_specs,
        out_shape=out_shape,
        compiler_params=pltpu.CompilerParams(dimension_semantics=("arbitrary",)),
    )(*kernel_inputs)

    out = logits2d.reshape(B, T, OUT_DIM)
    attn = attn_flat.reshape(B, T, N_HEADS, T).transpose(0, 2, 1, 3)  # [B,NH,T,T]
    return out, attn


# ------------------------------ parameters ------------------------------------
def init_params(key):
    def nrm(k, shape, s=0.05):
        return jax.random.normal(k, shape, dtype=jnp.float32) * s

    keys = jax.random.split(key, 4 + N_LAYERS)
    params = {
        "pos_emb": nrm(keys[0], (MAX_LEN, HID), 1.0),
        "trg_emb": nrm(keys[1], (OUT_DIM, HID), 1.0),
        "fc_w": nrm(keys[2], (HID, OUT_DIM)),
        "fc_b": nrm(keys[3], (1, OUT_DIM)),
        "layers": [],
    }
    for li in range(N_LAYERS):
        lk = jax.random.split(keys[4 + li], 8)
        layer = [
            nrm(lk[0], (HID, HID)), nrm(lk[1], (1, HID)),     # wq, bq
            nrm(lk[2], (HID, HID)), nrm(lk[3], (1, HID)),     # wk, bk
            nrm(lk[4], (HID, HID)), nrm(lk[5], (1, HID)),     # wv, bv
            nrm(lk[6], (HID, HID)), nrm(lk[7], (1, HID)),     # wo, bo
            jnp.ones((1, HID), jnp.float32), jnp.zeros((1, HID), jnp.float32),  # LN att
            nrm(jax.random.fold_in(lk[0], 1), (HID, PF_DIM)),
            nrm(jax.random.fold_in(lk[1], 1), (1, PF_DIM)),   # w1, b1
            nrm(jax.random.fold_in(lk[2], 1), (PF_DIM, HID)),
            nrm(jax.random.fold_in(lk[3], 1), (1, HID)),      # w2, b2
            jnp.ones((1, HID), jnp.float32), jnp.zeros((1, HID), jnp.float32),  # LN ff
        ]
        params["layers"].append(layer)
    return params


# ------------------------------ pure-JAX reference ------------------------------
def _ref_layer(x, mask, p):
    (wq, bq, wk, bk, wv, bv, wo, bo, g1, be1,
     w1, b1, w2, b2, g2, be2) = p
    q, k, v = x @ wq + bq, x @ wk + bk, x @ wv + bv

    def split(t):
        return t.reshape(B, T, N_HEADS, HEAD_DIM).transpose(0, 2, 1, 3)

    Q, K, V = split(q), split(k), split(v)
    e = jnp.einsum("bhqd,bhkd->bhqk", Q, K) / jnp.float32(math.sqrt(HEAD_DIM))
    e = jnp.where(mask[:, None] == 0, -1e10, e)
    a = jax.nn.softmax(e, axis=-1)
    ctx = jnp.einsum("bhqk,bhkd->bhqd", a, V).transpose(0, 2, 1, 3).reshape(B, T, HID)
    att_out = ctx @ wo + bo
    trg = _layernorm(x + att_out, g1, be1)
    ff = jnp.maximum(trg @ w1 + b1, 0.0) @ w2 + b2
    return _layernorm(trg + ff, g2, be2), a


def decoder_forward_ref(tokens, params):
    pad_mask = (tokens != TRG_PAD_IDX)
    tril = jnp.tril(jnp.ones((T, T), dtype=bool))
    mask = (pad_mask[:, None, :] & tril[None]).astype(jnp.float32)
    pos_e = params["pos_emb"][:T]
    trg_e = jnp.take(params["trg_emb"], tokens, axis=0)
    x = pos_e[None, :, :] + trg_e * jnp.float32(math.sqrt(HID))
    trg, attn = None, None
    for lp in params["layers"]:
        # faithful to the PyTorch bug: every layer consumes the embeddings x
        trg, attn = _ref_layer(x, mask, lp)
    out = trg @ params["fc_w"] + params["fc_b"]
    return out, attn


# ----------------------------------- main ---------------------------------------
if __name__ == "__main__":
    key = jax.random.PRNGKey(0)
    pkey, tkey = jax.random.split(key)
    params = init_params(pkey)

    # tokens in [2, OUT_DIM) so no padding tokens (pure causal mask)
    tokens = jax.random.randint(tkey, (B, T), 2, OUT_DIM, dtype=jnp.int32)

    out, attn = decoder_forward(tokens, params)
    out = jax.block_until_ready(out)
    attn = jax.block_until_ready(attn)

    out_ref, attn_ref = decoder_forward_ref(tokens, params)
    assert out.shape == (B, T, OUT_DIM)
    assert attn.shape == (B, N_HEADS, T, T)
    assert jnp.allclose(out, out_ref, atol=1e-2, rtol=1e-2)
    assert jnp.allclose(attn, attn_ref, atol=1e-2, rtol=1e-2)

    print("KERNEL_OK")
</pallas_src>

<mosaic_0001>
module attributes {stable_mosaic.version = 11 : i64} {
  func.func @fused_decoder_kernel(%arg0: i32, %arg1: memref<16x32xf32, #tpu.memory_space<vmem>>, %arg2: memref<16x16xf32, #tpu.memory_space<vmem>>, %arg3: memref<32x96xf32, #tpu.memory_space<vmem>>, %arg4: memref<1x96xf32, #tpu.memory_space<vmem>>, %arg5: memref<32x32xf32, #tpu.memory_space<vmem>>, %arg6: memref<1x32xf32, #tpu.memory_space<vmem>>, %arg7: memref<1x32xf32, #tpu.memory_space<vmem>>, %arg8: memref<1x32xf32, #tpu.memory_space<vmem>>, %arg9: memref<32x64xf32, #tpu.memory_space<vmem>>, %arg10: memref<1x64xf32, #tpu.memory_space<vmem>>, %arg11: memref<64x32xf32, #tpu.memory_space<vmem>>, %arg12: memref<1x32xf32, #tpu.memory_space<vmem>>, %arg13: memref<1x32xf32, #tpu.memory_space<vmem>>, %arg14: memref<1x32xf32, #tpu.memory_space<vmem>>, %arg15: memref<32x128xf32, #tpu.memory_space<vmem>>, %arg16: memref<1x128xf32, #tpu.memory_space<vmem>>, %arg17: memref<16x128xf32, #tpu.memory_space<vmem>>, %arg18: memref<16x32xf32, #tpu.memory_space<vmem>>) attributes {dimension_semantics = [#tpu.dimension_semantics<arbitrary>], iteration_bounds = array<i64: 1>, scalar_prefetch = 0 : i64, scratch_operands = 0 : i64, tpu.core_type = #tpu.core_type<tc>, window_params = [{pipeline_mode = #tpu.pipeline_mode<synchronous>, transform_indices = @transform_0, window_bounds = array<i64: 16, 32>}, {pipeline_mode = #tpu.pipeline_mode<synchronous>, transform_indices = @transform_1, window_bounds = array<i64: 16, 16>}, {pipeline_mode = #tpu.pipeline_mode<synchronous>, transform_indices = @transform_2, window_bounds = array<i64: 32, 96>}, {pipeline_mode = #tpu.pipeline_mode<synchronous>, transform_indices = @transform_3, window_bounds = array<i64: 1, 96>}, {pipeline_mode = #tpu.pipeline_mode<synchronous>, transform_indices = @transform_4, window_bounds = array<i64: 32, 32>}, {pipeline_mode = #tpu.pipeline_mode<synchronous>, transform_indices = @transform_5, window_bounds = array<i64: 1, 32>}, {pipeline_mode = #tpu.pipeline_mode<synchronous>, transform_indices = @transform_6, window_bounds = array<i64: 1, 32>}, {pipeline_mode = #tpu.pipeline_mode<synchronous>, transform_indices = @transform_7, window_bounds = array<i64: 1, 32>}, {pipeline_mode = #tpu.pipeline_mode<synchronous>, transform_indices = @transform_8, window_bounds = array<i64: 32, 64>}, {pipeline_mode = #tpu.pipeline_mode<synchronous>, transform_indices = @transform_9, window_bounds = array<i64: 1, 64>}, {pipeline_mode = #tpu.pipeline_mode<synchronous>, transform_indices = @transform_10, window_bounds = array<i64: 64, 32>}, {pipeline_mode = #tpu.pipeline_mode<synchronous>, transform_indices = @transform_11, window_bounds = array<i64: 1, 32>}, {pipeline_mode = #tpu.pipeline_mode<synchronous>, transform_indices = @transform_12, window_bounds = array<i64: 1, 32>}, {pipeline_mode = #tpu.pipeline_mode<synchronous>, transform_indices = @transform_13, window_bounds = array<i64: 1, 32>}, {pipeline_mode = #tpu.pipeline_mode<synchronous>, transform_indices = @transform_14, window_bounds = array<i64: 32, 128>}, {pipeline_mode = #tpu.pipeline_mode<synchronous>, transform_indices = @transform_15, window_bounds = array<i64: 1, 128>}, {pipeline_mode = #tpu.pipeline_mode<synchronous>, transform_indices = @transform_16, window_bounds = array<i64: 16, 128>}, {pipeline_mode = #tpu.pipeline_mode<synchronous>, transform_indices = @transform_17, window_bounds = array<i64: 16, 32>}]} {
    %c0 = arith.constant 0 : index
    %c0_0 = arith.constant 0 : index
    %0 = vector.load %arg1[%c0, %c0_0] : memref<16x32xf32, #tpu.memory_space<vmem>>, vector<16x32xf32>
    %c0_1 = arith.constant 0 : index
    %c0_2 = arith.constant 0 : index
    %1 = vector.load %arg2[%c0_1, %c0_2] : memref<16x16xf32, #tpu.memory_space<vmem>>, vector<16x16xf32>
    %c0_3 = arith.constant 0 : index
    %c0_4 = arith.constant 0 : index
    %2 = vector.load %arg3[%c0_3, %c0_4] : memref<32x96xf32, #tpu.memory_space<vmem>>, vector<32x96xf32>
    %cst = arith.constant dense<0.000000e+00> : vector<16x96xf32>
    %3 = tpu.matmul %0, %2, %cst {dimension_numbers = #tpu.dot_dimension_numbers<[1], [0], [0], [1], [0, 0, 1, 1], [], []>} : vector<16x32xf32>, vector<32x96xf32>, vector<16x96xf32> -> vector<16x96xf32>
    %c0_5 = arith.constant 0 : index
    %c0_6 = arith.constant 0 : index
    %4 = vector.load %arg4[%c0_5, %c0_6] : memref<1x96xf32, #tpu.memory_space<vmem>>, vector<1x96xf32>
    %5 = vector.broadcast %4 : vector<1x96xf32> to vector<16x96xf32>
    %6 = arith.addf %3, %5 : vector<16x96xf32>
    %7 = vector.extract_strided_slice %6 {offsets = [0, 0], sizes = [16, 8], strides = [1, 1]} : vector<16x96xf32> to vector<16x8xf32>
    %8 = vector.extract_strided_slice %6 {offsets = [0, 32], sizes = [16, 8], strides = [1, 1]} : vector<16x96xf32> to vector<16x8xf32>
    %9 = vector.extract_strided_slice %6 {offsets = [0, 64], sizes = [16, 8], strides = [1, 1]} : vector<16x96xf32> to vector<16x8xf32>
    %10 = tpu.transpose %8, [1, 0] : vector<16x8xf32> -> vector<8x16xf32>
    %cst_7 = arith.constant dense<0.000000e+00> : vector<16x16xf32>
    %11 = tpu.matmul %7, %10, %cst_7 {dimension_numbers = #tpu.dot_dimension_numbers<[1], [0], [0], [1], [0, 0, 1, 1], [], []>} : vector<16x8xf32>, vector<8x16xf32>, vector<16x16xf32> -> vector<16x16xf32>
    %cst_8 = arith.constant 0.353553385 : f32
    %12 = vector.broadcast %cst_8 : f32 to vector<16x16xf32>
    %13 = arith.mulf %11, %12 : vector<16x16xf32>
    %14 = arith.addf %13, %1 : vector<16x16xf32>
    %cst_9 = arith.constant dense<0xFF800000> : vector<16xf32>
    %15 = vector.multi_reduction <maximumf>, %14, %cst_9 [1] : vector<16x16xf32> to vector<16xf32>
    %16 = vector.shape_cast %15 : vector<16xf32> to vector<16x1xf32>
    %17 = vector.broadcast %16 : vector<16x1xf32> to vector<16x16xf32>
    %18 = arith.subf %14, %17 : vector<16x16xf32>
    %19 = math.exp %18 : vector<16x16xf32>
    %cst_10 = arith.constant dense<0.000000e+00> : vector<16xf32>
    %20 = vector.multi_reduction <add>, %19, %cst_10 [1] : vector<16x16xf32> to vector<16xf32>
    %21 = vector.shape_cast %20 : vector<16xf32> to vector<16x1xf32>
    %22 = tpu.reciprocal %21 {approx = true} : vector<16x1xf32> -> vector<16x1xf32>
    %23 = vector.broadcast %22 : vector<16x1xf32> to vector<16x16xf32>
    %24 = arith.mulf %19, %23 : vector<16x16xf32>
    %cst_11 = arith.constant dense<0.000000e+00> : vector<16x8xf32>
    %25 = tpu.matmul %24, %9, %cst_11 {dimension_numbers = #tpu.dot_dimension_numbers<[1], [0], [0], [1], [0, 0, 1, 1], [], []>} : vector<16x16xf32>, vector<16x8xf32>, vector<16x8xf32> -> vector<16x8xf32>
    %26 = vector.extract_strided_slice %24 {offsets = [0, 0], sizes = [8, 8], strides = [1, 1]} : vector<16x16xf32> to vector<8x8xf32>
    %27 = vector.extract_strided_slice %24 {offsets = [8, 8], sizes = [8, 8], strides = [1, 1]} : vector<16x16xf32> to vector<8x8xf32>
    %28 = tpu.concatenate %26, %27 in 0 : vector<8x8xf32>, vector<8x8xf32> -> vector<16x8xf32>
    %29 = vector.extract_strided_slice %6 {offsets = [0, 8], sizes = [16, 8], strides = [1, 1]} : vector<16x96xf32> to vector<16x8xf32>
    %30 = vector.extract_strided_slice %6 {offsets = [0, 40], sizes = [16, 8], strides = [1, 1]} : vector<16x96xf32> to vector<16x8xf32>
    %31 = vector.extract_strided_slice %6 {offsets = [0, 72], sizes = [16, 8], strides = [1, 1]} : vector<16x96xf32> to vector<16x8xf32>
    %32 = tpu.transpose %30, [1, 0] : vector<16x8xf32> -> vector<8x16xf32>
    %cst_12 = arith.constant dense<0.000000e+00> : vector<16x16xf32>
    %33 = tpu.matmul %29, %32, %cst_12 {dimension_numbers = #tpu.dot_dimension_numbers<[1], [0], [0], [1], [0, 0, 1, 1], [], []>} : vector<16x8xf32>, vector<8x16xf32>, vector<16x16xf32> -> vector<16x16xf32>
    %cst_13 = arith.constant 0.353553385 : f32
    %34 = vector.broadcast %cst_13 : f32 to vector<16x16xf32>
    %35 = arith.mulf %33, %34 : vector<16x16xf32>
    %36 = arith.addf %35, %1 : vector<16x16xf32>
    %cst_14 = arith.constant dense<0xFF800000> : vector<16xf32>
    %37 = vector.multi_reduction <maximumf>, %36, %cst_14 [1] : vector<16x16xf32> to vector<16xf32>
    %38 = vector.shape_cast %37 : vector<16xf32> to vector<16x1xf32>
    %39 = vector.broadcast %38 : vector<16x1xf32> to vector<16x16xf32>
    %40 = arith.subf %36, %39 : vector<16x16xf32>
    %41 = math.exp %40 : vector<16x16xf32>
    %cst_15 = arith.constant dense<0.000000e+00> : vector<16xf32>
    %42 = vector.multi_reduction <add>, %41, %cst_15 [1] : vector<16x16xf32> to vector<16xf32>
    %43 = vector.shape_cast %42 : vector<16xf32> to vector<16x1xf32>
    %44 = tpu.reciprocal %43 {approx = true} : vector<16x1xf32> -> vector<16x1xf32>
    %45 = vector.broadcast %44 : vector<16x1xf32> to vector<16x16xf32>
    %46 = arith.mulf %41, %45 : vector<16x16xf32>
    %cst_16 = arith.constant dense<0.000000e+00> : vector<16x8xf32>
    %47 = tpu.matmul %46, %31, %cst_16 {dimension_numbers = #tpu.dot_dimension_numbers<[1], [0], [0], [1], [0, 0, 1, 1], [], []>} : vector<16x16xf32>, vector<16x8xf32>, vector<16x8xf32> -> vector<16x8xf32>
    %48 = vector.extract_strided_slice %46 {offsets = [0, 0], sizes = [8, 8], strides = [1, 1]} : vector<16x16xf32> to vector<8x8xf32>
    %49 = vector.extract_strided_slice %46 {offsets = [8, 8], sizes = [8, 8], strides = [1, 1]} : vector<16x16xf32> to vector<8x8xf32>
    %50 = tpu.concatenate %48, %49 in 0 : vector<8x8xf32>, vector<8x8xf32> -> vector<16x8xf32>
    %51 = vector.extract_strided_slice %6 {offsets = [0, 16], sizes = [16, 8], strides = [1, 1]} : vector<16x96xf32> to vector<16x8xf32>
    %52 = vector.extract_strided_slice %6 {offsets = [0, 48], sizes = [16, 8], strides = [1, 1]} : vector<16x96xf32> to vector<16x8xf32>
    %53 = vector.extract_strided_slice %6 {offsets = [0, 80], sizes = [16, 8], strides = [1, 1]} : vector<16x96xf32> to vector<16x8xf32>
    %54 = tpu.transpose %52, [1, 0] : vector<16x8xf32> -> vector<8x16xf32>
    %cst_17 = arith.constant dense<0.000000e+00> : vector<16x16xf32>
    %55 = tpu.matmul %51, %54, %cst_17 {dimension_numbers = #tpu.dot_dimension_numbers<[1], [0], [0], [1], [0, 0, 1, 1], [], []>} : vector<16x8xf32>, vector<8x16xf32>, vector<16x16xf32> -> vector<16x16xf32>
    %cst_18 = arith.constant 0.353553385 : f32
    %56 = vector.broadcast %cst_18 : f32 to vector<16x16xf32>
    %57 = arith.mulf %55, %56 : vector<16x16xf32>
    %58 = arith.addf %57, %1 : vector<16x16xf32>
    %cst_19 = arith.constant dense<0xFF800000> : vector<16xf32>
    %59 = vector.multi_reduction <maximumf>, %58, %cst_19 [1] : vector<16x16xf32> to vector<16xf32>
    %60 = vector.shape_cast %59 : vector<16xf32> to vector<16x1xf32>
    %61 = vector.broadcast %60 : vector<16x1xf32> to vector<16x16xf32>
    %62 = arith.subf %58, %61 : vector<16x16xf32>
    %63 = math.exp %62 : vector<16x16xf32>
    %cst_20 = arith.constant dense<0.000000e+00> : vector<16xf32>
    %64 = vector.multi_reduction <add>, %63, %cst_20 [1] : vector<16x16xf32> to vector<16xf32>
    %65 = vector.shape_cast %64 : vector<16xf32> to vector<16x1xf32>
    %66 = tpu.reciprocal %65 {approx = true} : vector<16x1xf32> -> vector<16x1xf32>
    %67 = vector.broadcast %66 : vector<16x1xf32> to vector<16x16xf32>
    %68 = arith.mulf %63, %67 : vector<16x16xf32>
    %cst_21 = arith.constant dense<0.000000e+00> : vector<16x8xf32>
    %69 = tpu.matmul %68, %53, %cst_21 {dimension_numbers = #tpu.dot_dimension_numbers<[1], [0], [0], [1], [0, 0, 1, 1], [], []>} : vector<16x16xf32>, vector<16x8xf32>, vector<16x8xf32> -> vector<16x8xf32>
    %70 = vector.extract_strided_slice %68 {offsets = [0, 0], sizes = [8, 8], strides = [1, 1]} : vector<16x16xf32> to vector<8x8xf32>
    %71 = vector.extract_strided_slice %68 {offsets = [8, 8], sizes = [8, 8], strides = [1, 1]} : vector<16x16xf32> to vector<8x8xf32>
    %72 = tpu.concatenate %70, %71 in 0 : vector<8x8xf32>, vector<8x8xf32> -> vector<16x8xf32>
    %73 = vector.extract_strided_slice %6 {offsets = [0, 24], sizes = [16, 8], strides = [1, 1]} : vector<16x96xf32> to vector<16x8xf32>
    %74 = vector.extract_strided_slice %6 {offsets = [0, 56], sizes = [16, 8], strides = [1, 1]} : vector<16x96xf32> to vector<16x8xf32>
    %75 = vector.extract_strided_slice %6 {offsets = [0, 88], sizes = [16, 8], strides = [1, 1]} : vector<16x96xf32> to vector<16x8xf32>
    %76 = tpu.transpose %74, [1, 0] : vector<16x8xf32> -> vector<8x16xf32>
    %cst_22 = arith.constant dense<0.000000e+00> : vector<16x16xf32>
    %77 = tpu.matmul %73, %76, %cst_22 {dimension_numbers = #tpu.dot_dimension_numbers<[1], [0], [0], [1], [0, 0, 1, 1], [], []>} : vector<16x8xf32>, vector<8x16xf32>, vector<16x16xf32> -> vector<16x16xf32>
    %cst_23 = arith.constant 0.353553385 : f32
    %78 = vector.broadcast %cst_23 : f32 to vector<16x16xf32>
    %79 = arith.mulf %77, %78 : vector<16x16xf32>
    %80 = arith.addf %79, %1 : vector<16x16xf32>
    %cst_24 = arith.constant dense<0xFF800000> : vector<16xf32>
    %81 = vector.multi_reduction <maximumf>, %80, %cst_24 [1] : vector<16x16xf32> to vector<16xf32>
    %82 = vector.shape_cast %81 : vector<16xf32> to vector<16x1xf32>
    %83 = vector.broadcast %82 : vector<16x1xf32> to vector<16x16xf32>
    %84 = arith.subf %80, %83 : vector<16x16xf32>
    %85 = math.exp %84 : vector<16x16xf32>
    %cst_25 = arith.constant dense<0.000000e+00> : vector<16xf32>
    %86 = vector.multi_reduction <add>, %85, %cst_25 [1] : vector<16x16xf32> to vector<16xf32>
    %87 = vector.shape_cast %86 : vector<16xf32> to vector<16x1xf32>
    %88 = tpu.reciprocal %87 {approx = true} : vector<16x1xf32> -> vector<16x1xf32>
    %89 = vector.broadcast %88 : vector<16x1xf32> to vector<16x16xf32>
    %90 = arith.mulf %85, %89 : vector<16x16xf32>
    %cst_26 = arith.constant dense<0.000000e+00> : vector<16x8xf32>
    %91 = tpu.matmul %90, %75, %cst_26 {dimension_numbers = #tpu.dot_dimension_numbers<[1], [0], [0], [1], [0, 0, 1, 1], [], []>} : vector<16x16xf32>, vector<16x8xf32>, vector<16x8xf32> -> vector<16x8xf32>
    %92 = vector.extract_strided_slice %90 {offsets = [0, 0], sizes = [8, 8], strides = [1, 1]} : vector<16x16xf32> to vector<8x8xf32>
    %93 = vector.extract_strided_slice %90 {offsets = [8, 8], sizes = [8, 8], strides = [1, 1]} : vector<16x16xf32> to vector<8x8xf32>
    %94 = tpu.concatenate %92, %93 in 0 : vector<8x8xf32>, vector<8x8xf32> -> vector<16x8xf32>
    %95 = tpu.concatenate %25, %47, %69, %91 in 1 : vector<16x8xf32>, vector<16x8xf32>, vector<16x8xf32>, vector<16x8xf32> -> vector<16x32xf32>
    %c0_27 = arith.constant 0 : index
    %c0_28 = arith.constant 0 : index
    %96 = vector.load %arg5[%c0_27, %c0_28] : memref<32x32xf32, #tpu.memory_space<vmem>>, vector<32x32xf32>
    %cst_29 = arith.constant dense<0.000000e+00> : vector<16x32xf32>
    %97 = tpu.matmul %95, %96, %cst_29 {dimension_numbers = #tpu.dot_dimension_numbers<[1], [0], [0], [1], [0, 0, 1, 1], [], []>} : vector<16x32xf32>, vector<32x32xf32>, vector<16x32xf32> -> vector<16x32xf32>
    %c0_30 = arith.constant 0 : index
    %c0_31 = arith.constant 0 : index
    %98 = vector.load %arg6[%c0_30, %c0_31] : memref<1x32xf32, #tpu.memory_space<vmem>>, vector<1x32xf32>
    %99 = vector.broadcast %98 : vector<1x32xf32> to vector<16x32xf32>
    %100 = arith.addf %97, %99 : vector<16x32xf32>
    %101 = arith.addf %0, %100 : vector<16x32xf32>
    %c0_32 = arith.constant 0 : index
    %c0_33 = arith.constant 0 : index
    %102 = vector.load %arg7[%c0_32, %c0_33] : memref<1x32xf32, #tpu.memory_space<vmem>>, vector<1x32xf32>
    %c0_34 = arith.constant 0 : index
    %c0_35 = arith.constant 0 : index
    %103 = vector.load %arg8[%c0_34, %c0_35] : memref<1x32xf32, #tpu.memory_space<vmem>>, vector<1x32xf32>
    %cst_36 = arith.constant dense<0.000000e+00> : vector<16xf32>
    %104 = vector.multi_reduction <add>, %101, %cst_36 [1] : vector<16x32xf32> to vector<16xf32>
    %105 = vector.shape_cast %104 : vector<16xf32> to vector<16x1xf32>
    %cst_37 = arith.constant 3.200000e+01 : f32
    %106 = vector.broadcast %cst_37 : f32 to vector<16x1xf32>
    %107 = arith.divf %105, %106 : vector<16x1xf32>
    %108 = vector.broadcast %107 : vector<16x1xf32> to vector<16x32xf32>
    %109 = arith.subf %101, %108 : vector<16x32xf32>
    %110 = arith.mulf %109, %109 : vector<16x32xf32>
    %cst_38 = arith.constant dense<0.000000e+00> : vector<16xf32>
    %111 = vector.multi_reduction <add>, %110, %cst_38 [1] : vector<16x32xf32> to vector<16xf32>
    %112 = vector.shape_cast %111 : vector<16xf32> to vector<16x1xf32>
    %cst_39 = arith.constant 3.200000e+01 : f32
    %113 = vector.broadcast %cst_39 : f32 to vector<16x1xf32>
    %114 = arith.divf %112, %113 : vector<16x1xf32>
    %115 = vector.broadcast %107 : vector<16x1xf32> to vector<16x32xf32>
    %116 = arith.subf %101, %115 : vector<16x32xf32>
    %cst_40 = arith.constant 9.99999974E-6 : f32
    %117 = vector.broadcast %cst_40 : f32 to vector<16x1xf32>
    %118 = arith.addf %114, %117 : vector<16x1xf32>
    %119 = math.rsqrt %118 : vector<16x1xf32>
    %120 = vector.broadcast %119 : vector<16x1xf32> to vector<16x32xf32>
    %121 = arith.mulf %116, %120 : vector<16x32xf32>
    %122 = vector.broadcast %102 : vector<1x32xf32> to vector<16x32xf32>
    %123 = arith.mulf %121, %122 : vector<16x32xf32>
    %124 = vector.broadcast %103 : vector<1x32xf32> to vector<16x32xf32>
    %125 = arith.addf %123, %124 : vector<16x32xf32>
    %c0_41 = arith.constant 0 : index
    %c0_42 = arith.constant 0 : index
    %126 = vector.load %arg9[%c0_41, %c0_42] : memref<32x64xf32, #tpu.memory_space<vmem>>, vector<32x64xf32>
    %cst_43 = arith.constant dense<0.000000e+00> : vector<16x64xf32>
    %127 = tpu.matmul %125, %126, %cst_43 {dimension_numbers = #tpu.dot_dimension_numbers<[1], [0], [0], [1], [0, 0, 1, 1], [], []>} : vector<16x32xf32>, vector<32x64xf32>, vector<16x64xf32> -> vector<16x64xf32>
    %c0_44 = arith.constant 0 : index
    %c0_45 = arith.constant 0 : index
    %128 = vector.load %arg10[%c0_44, %c0_45] : memref<1x64xf32, #tpu.memory_space<vmem>>, vector<1x64xf32>
    %129 = vector.broadcast %128 : vector<1x64xf32> to vector<16x64xf32>
    %130 = arith.addf %127, %129 : vector<16x64xf32>
    %cst_46 = arith.constant 0.000000e+00 : f32
    %131 = vector.broadcast %cst_46 : f32 to vector<16x64xf32>
    %132 = arith.maximumf %130, %131 : vector<16x64xf32>
    %c0_47 = arith.constant 0 : index
    %c0_48 = arith.constant 0 : index
    %133 = vector.load %arg11[%c0_47, %c0_48] : memref<64x32xf32, #tpu.memory_space<vmem>>, vector<64x32xf32>
    %cst_49 = arith.constant dense<0.000000e+00> : vector<16x32xf32>
    %134 = tpu.matmul %132, %133, %cst_49 {dimension_numbers = #tpu.dot_dimension_numbers<[1], [0], [0], [1], [0, 0, 1, 1], [], []>} : vector<16x64xf32>, vector<64x32xf32>, vector<16x32xf32> -> vector<16x32xf32>
    %c0_50 = arith.constant 0 : index
    %c0_51 = arith.constant 0 : index
    %135 = vector.load %arg12[%c0_50, %c0_51] : memref<1x32xf32, #tpu.memory_space<vmem>>, vector<1x32xf32>
    %136 = vector.broadcast %135 : vector<1x32xf32> to vector<16x32xf32>
    %137 = arith.addf %134, %136 : vector<16x32xf32>
    %138 = arith.addf %125, %137 : vector<16x32xf32>
    %c0_52 = arith.constant 0 : index
    %c0_53 = arith.constant 0 : index
    %139 = vector.load %arg13[%c0_52, %c0_53] : memref<1x32xf32, #tpu.memory_space<vmem>>, vector<1x32xf32>
    %c0_54 = arith.constant 0 : index
    %c0_55 = arith.constant 0 : index
    %140 = vector.load %arg14[%c0_54, %c0_55] : memref<1x32xf32, #tpu.memory_space<vmem>>, vector<1x32xf32>
    %cst_56 = arith.constant dense<0.000000e+00> : vector<16xf32>
    %141 = vector.multi_reduction <add>, %138, %cst_56 [1] : vector<16x32xf32> to vector<16xf32>
    %142 = vector.shape_cast %141 : vector<16xf32> to vector<16x1xf32>
    %cst_57 = arith.constant 3.200000e+01 : f32
    %143 = vector.broadcast %cst_57 : f32 to vector<16x1xf32>
    %144 = arith.divf %142, %143 : vector<16x1xf32>
    %145 = vector.broadcast %144 : vector<16x1xf32> to vector<16x32xf32>
    %146 = arith.subf %138, %145 : vector<16x32xf32>
    %147 = arith.mulf %146, %146 : vector<16x32xf32>
    %cst_58 = arith.constant dense<0.000000e+00> : vector<16xf32>
    %148 = vector.multi_reduction <add>, %147, %cst_58 [1] : vector<16x32xf32> to vector<16xf32>
    %149 = vector.shape_cast %148 : vector<16xf32> to vector<16x1xf32>
    %cst_59 = arith.constant 3.200000e+01 : f32
    %150 = vector.broadcast %cst_59 : f32 to vector<16x1xf32>
    %151 = arith.divf %149, %150 : vector<16x1xf32>
    %152 = vector.broadcast %144 : vector<16x1xf32> to vector<16x32xf32>
    %153 = arith.subf %138, %152 : vector<16x32xf32>
    %cst_60 = arith.constant 9.99999974E-6 : f32
    %154 = vector.broadcast %cst_60 : f32 to vector<16x1xf32>
    %155 = arith.addf %151, %154 : vector<16x1xf32>
    %156 = math.rsqrt %155 : vector<16x1xf32>
    %157 = vector.broadcast %156 : vector<16x1xf32> to vector<16x32xf32>
    %158 = arith.mulf %153, %157 : vector<16x32xf32>
    %159 = vector.broadcast %139 : vector<1x32xf32> to vector<16x32xf32>
    %160 = arith.mulf %158, %159 : vector<16x32xf32>
    %161 = vector.broadcast %140 : vector<1x32xf32> to vector<16x32xf32>
    %162 = arith.addf %160, %161 : vector<16x32xf32>
    %c0_61 = arith.constant 0 : index
    %c0_62 = arith.constant 0 : index
    %163 = vector.load %arg15[%c0_61, %c0_62] : memref<32x128xf32, #tpu.memory_space<vmem>>, vector<32x128xf32>
    %cst_63 = arith.constant dense<0.000000e+00> : vector<16x128xf32>
    %164 = tpu.matmul %162, %163, %cst_63 {dimension_numbers = #tpu.dot_dimension_numbers<[1], [0], [0], [1], [0, 0, 1, 1], [], []>} : vector<16x32xf32>, vector<32x128xf32>, vector<16x128xf32> -> vector<16x128xf32>
    %c0_64 = arith.constant 0 : index
    %c0_65 = arith.constant 0 : index
    %165 = vector.load %arg16[%c0_64, %c0_65] : memref<1x128xf32, #tpu.memory_space<vmem>>, vector<1x128xf32>
    %166 = vector.broadcast %165 : vector<1x128xf32> to vector<16x128xf32>
    %167 = arith.addf %164, %166 : vector<16x128xf32>
    %c0_66 = arith.constant 0 : index
    %c0_67 = arith.constant 0 : index
    %168 = vector.load %arg17[%c0_66, %c0_67] : memref<16x128xf32, #tpu.memory_space<vmem>>, vector<16x128xf32>
    tpu.vector_store %arg17[%c0_66, %c0_67], %167 {strides = array<i32>} : memref<16x128xf32, #tpu.memory_space<vmem>>, vector<16x128xf32>,
    %169 = tpu.concatenate %28, %50, %72, %94 in 1 : vector<16x8xf32>, vector<16x8xf32>, vector<16x8xf32>, vector<16x8xf32> -> vector<16x32xf32>
    %c0_68 = arith.constant 0 : index
    %c0_69 = arith.constant 0 : index
    %170 = vector.load %arg18[%c0_68, %c0_69] : memref<16x32xf32, #tpu.memory_space<vmem>>, vector<16x32xf32>
    tpu.vector_store %arg18[%c0_68, %c0_69], %169 {strides = array<i32>} : memref<16x32xf32, #tpu.memory_space<vmem>>, vector<16x32xf32>,
    return
  }
  func.func @transform_0(%arg0: i32) -> (i32, i32) {
    %c0_i32 = arith.constant 0 : i32
    %c0_i32_0 = arith.constant 0 : i32
    %c0_i32_1 = arith.constant 0 : i32
    return %c0_i32, %c0_i32_0 : i32, i32
  }
  func.func @transform_1(%arg0: i32) -> (i32, i32) {
    %c0_i32 = arith.constant 0 : i32
    %c0_i32_0 = arith.constant 0 : i32
    %c0_i32_1 = arith.constant 0 : i32
    return %c0_i32, %c0_i32_0 : i32, i32
  }
  func.func @transform_2(%arg0: i32) -> (i32, i32) {
    %c0_i32 = arith.constant 0 : i32
    %c0_i32_0 = arith.constant 0 : i32
    %c0_i32_1 = arith.constant 0 : i32
    return %c0_i32, %c0_i32_0 : i32, i32
  }
  func.func @transform_3(%arg0: i32) -> (i32, i32) {
    %c0_i32 = arith.constant 0 : i32
    %c0_i32_0 = arith.constant 0 : i32
    %c0_i32_1 = arith.constant 0 : i32
    return %c0_i32, %c0_i32_0 : i32, i32
  }
  func.func @transform_4(%arg0: i32) -> (i32, i32) {
    %c0_i32 = arith.constant 0 : i32
    %c0_i32_0 = arith.constant 0 : i32
    %c0_i32_1 = arith.constant 0 : i32
    return %c0_i32, %c0_i32_0 : i32, i32
  }
  func.func @transform_5(%arg0: i32) -> (i32, i32) {
    %c0_i32 = arith.constant 0 : i32
    %c0_i32_0 = arith.constant 0 : i32
    %c0_i32_1 = arith.constant 0 : i32
    return %c0_i32, %c0_i32_0 : i32, i32
  }
  func.func @transform_6(%arg0: i32) -> (i32, i32) {
    %c0_i32 = arith.constant 0 : i32
    %c0_i32_0 = arith.constant 0 : i32
    %c0_i32_1 = arith.constant 0 : i32
    return %c0_i32, %c0_i32_0 : i32, i32
  }
  func.func @transform_7(%arg0: i32) -> (i32, i32) {
    %c0_i32 = arith.constant 0 : i32
    %c0_i32_0 = arith.constant 0 : i32
    %c0_i32_1 = arith.constant 0 : i32
    return %c0_i32, %c0_i32_0 : i32, i32
  }
  func.func @transform_8(%arg0: i32) -> (i32, i32) {
    %c0_i32 = arith.constant 0 : i32
    %c0_i32_0 = arith.constant 0 : i32
    %c0_i32_1 = arith.constant 0 : i32
    return %c0_i32, %c0_i32_0 : i32, i32
  }
  func.func @transform_9(%arg0: i32) -> (i32, i32) {
    %c0_i32 = arith.constant 0 : i32
    %c0_i32_0 = arith.constant 0 : i32
    %c0_i32_1 = arith.constant 0 : i32
    return %c0_i32, %c0_i32_0 : i32, i32
  }
  func.func @transform_10(%arg0: i32) -> (i32, i32) {
    %c0_i32 = arith.constant 0 : i32
    %c0_i32_0 = arith.constant 0 : i32
    %c0_i32_1 = arith.constant 0 : i32
    return %c0_i32, %c0_i32_0 : i32, i32
  }
  func.func @transform_11(%arg0: i32) -> (i32, i32) {
    %c0_i32 = arith.constant 0 : i32
    %c0_i32_0 = arith.constant 0 : i32
    %c0_i32_1 = arith.constant 0 : i32
    return %c0_i32, %c0_i32_0 : i32, i32
  }
  func.func @transform_12(%arg0: i32) -> (i32, i32) {
    %c0_i32 = arith.constant 0 : i32
    %c0_i32_0 = arith.constant 0 : i32
    %c0_i32_1 = arith.constant 0 : i32
    return %c0_i32, %c0_i32_0 : i32, i32
  }
  func.func @transform_13(%arg0: i32) -> (i32, i32) {
    %c0_i32 = arith.constant 0 : i32
    %c0_i32_0 = arith.constant 0 : i32
    %c0_i32_1 = arith.constant 0 : i32
    return %c0_i32, %c0_i32_0 : i32, i32
  }
  func.func @transform_14(%arg0: i32) -> (i32, i32) {
    %c0_i32 = arith.constant 0 : i32
    %c0_i32_0 = arith.constant 0 : i32
    %c0_i32_1 = arith.constant 0 : i32
    return %c0_i32, %c0_i32_0 : i32, i32
  }
  func.func @transform_15(%arg0: i32) -> (i32, i32) {
    %c0_i32 = arith.constant 0 : i32
    %c0_i32_0 = arith.constant 0 : i32
    %c0_i32_1 = arith.constant 0 : i32
    return %c0_i32, %c0_i32_0 : i32, i32
  }
  func.func @transform_16(%arg0: i32) -> (i32, i32) {
    %c0_i32 = arith.constant 0 : i32
    %c0_i32_0 = arith.constant 0 : i32
    %c0_i32_1 = arith.constant 0 : i32
    return %c0_i32, %c0_i32_0 : i32, i32
  }
  func.func @transform_17(%arg0: i32) -> (i32, i32) {
    %c0_i32 = arith.constant 0 : i32
    %c0_i32_0 = arith.constant 0 : i32
    %c0_i32_1 = arith.constant 0 : i32
    return %c0_i32, %c0_i32_0 : i32, i32
  }
}

</mosaic_0001>

<llo_original>
// kernel: tpu_custom_call.1
$region0: #{tpu_custom_call.1}
  #allocation0 [shape = 'u32[]', space=smem, size = 0x4, offset = 0x4, fixed_abs, tag = 'smem constant byte address 0x4 - core index']
  #allocation1 [shape = 'u32[144,128]{1,0:T(1,128)}', space=vmem, size = 0x12000, scoped, tag = 'internal scratch']
  %s0 = inlined_call_operand.hbm [shape: f32[16,32], index: 0, kind: input, shape index: {}]
  %s1 = inlined_call_operand.hbm [shape: f32[16,16], index: 1, kind: input, shape index: {}]
  %s2 = inlined_call_operand.vmem [shape: f32[32,96], index: 2, kind: input, shape index: {}]
  %s3 = inlined_call_operand.vmem [shape: f32[1,96], index: 3, kind: input, shape index: {}]
  %s4 = inlined_call_operand.vmem [shape: f32[32,32], index: 4, kind: input, shape index: {}]
  %s5 = inlined_call_operand.vmem [shape: f32[1,32], index: 5, kind: input, shape index: {}]
  %s6 = inlined_call_operand.vmem [shape: f32[1,32], index: 6, kind: input, shape index: {}]
  %s7 = inlined_call_operand.vmem [shape: f32[1,32], index: 7, kind: input, shape index: {}]
  %s8 = inlined_call_operand.vmem [shape: f32[32,64], index: 8, kind: input, shape index: {}]
  %s9 = inlined_call_operand.vmem [shape: f32[1,64], index: 9, kind: input, shape index: {}]
  %s10 = inlined_call_operand.vmem [shape: f32[64,32], index: 10, kind: input, shape index: {}]
  %s11 = inlined_call_operand.vmem [shape: f32[1,32], index: 11, kind: input, shape index: {}]
  %s12 = inlined_call_operand.vmem [shape: f32[1,32], index: 12, kind: input, shape index: {}]
  %s13 = inlined_call_operand.vmem [shape: f32[1,32], index: 13, kind: input, shape index: {}]
  %s14 = inlined_call_operand.hbm [shape: f32[32,128], index: 14, kind: input, shape index: {}]
  %s15 = inlined_call_operand.vmem [shape: f32[1,128], index: 15, kind: input, shape index: {}]
  %s16 = inlined_call_operand.hbm [shape: f32[16,128], index: 16, kind: output, shape index: {0}]
  %s17 = inlined_call_operand.hbm [shape: f32[16,32], index: 17, kind: output, shape index: {1}]
  %18 = xla_tuple %s16, %s17
  %s19 = sld [smem:[#allocation0]]
  $region94: #{tpu_custom_call.1} parent=0
    _
  %s21 = ssub.s32 1, %s19
  %s22 = scalar_select 0, %s21, %s19
  $region1: #{tpu_custom_call.1} parent=0
    #allocation2 [shape = 'u8[8192]{0}', space=vmem, size = 0x2000, scoped, tag = 'input window, operand 0, single buffered']
    #allocation3 [shape = 's32[1]{0}', space=sflag, size = 0x4, scoped, tag = 'scoped memory for tpu_custom_call.1']
    #allocation4 [shape = 's32[1]{0}', space=sflag, size = 0x4, scoped, tag = 'scoped memory for tpu_custom_call.1']
    #allocation5 [shape = 'u8[8192]{0}', space=vmem, size = 0x2000, scoped, tag = 'input window, operand 1, single buffered']
    #allocation6 [shape = 's32[1]{0}', space=sflag, size = 0x4, scoped, tag = 'scoped memory for tpu_custom_call.1']
    #allocation7 [shape = 'u8[16384]{0}', space=vmem, size = 0x4000, scoped, tag = 'input window, operand 14, single buffered']
    #allocation8 [shape = 'u8[8192]{0}', space=vmem, size = 0x2000, scoped, tag = 'output window, operand 0, single buffered']
    #allocation9 [shape = 'u8[8192]{0}', space=vmem, size = 0x2000, scoped, tag = 'output window, operand 1, single buffered']
    #allocation10 [shape = 's32[1]{0}', space=sflag, size = 0x4, scoped, tag = 'scoped memory for tpu_custom_call.1']
    %23 = vsyncpa [#allocation3], 0
    %24 = vsyncpa [#allocation6], 0
    %25 = vsyncpa [#allocation4], 0
    %26 = vsyncpa [#allocation10], 0
    // Predicated region
    $region2: #{tpu_custom_call.1} parent=1 // pred_check
      _
    $region3: #{tpu_custom_call.1} parent=1 // pred_check_branch
      %28 = sbr.rel (0) target = $region5
    $region4: #{tpu_custom_call.1} parent=1 // pred_region
      %s30 = ssub.s32 256, 256
      %31 = vsyncadd [#allocation3], %s30
      %s32 = sshll.u32 [#allocation2], 4
      %s33 = int_to_ptr.vmem [resolvable:$true] %s32
      %38 = dma.hbm_to_vmem [thread:$0]  %s0, 256, %s33, [#allocation3], 128, 128, 8
    $region5: #{tpu_custom_call.1} parent=1 // pred_fallthru
      _
    // Predicated region
    $region6: #{tpu_custom_call.1} parent=1 // pred_check
      _
    $region7: #{tpu_custom_call.1} parent=1 // pred_check_branch
      %40 = sbr.rel (0) target = $region9
    $region8: #{tpu_custom_call.1} parent=1 // pred_region
      %s42 = ssub.s32 256, 256
      %43 = vsyncadd [#allocation6], %s42
      %s44 = sshll.u32 [#allocation5], 4
      %s45 = int_to_ptr.vmem [resolvable:$true] %s44
      %50 = dma.hbm_to_vmem [thread:$0]  %s1, 256, %s45, [#allocation6], 128, 128, 8
    $region9: #{tpu_custom_call.1} parent=1 // pred_fallthru
      _
    // Predicated region
    $region10: #{tpu_custom_call.1} parent=1 // pred_check
      _
    $region11: #{tpu_custom_call.1} parent=1 // pred_check_branch
      %52 = sbr.rel (0) target = $region13
    $region12: #{tpu_custom_call.1} parent=1 // pred_region
      _
    $region13: #{tpu_custom_call.1} parent=1 // pred_fallthru
      _
    // Predicated region
    $region14: #{tpu_custom_call.1} parent=1 // pred_check
      _
    $region15: #{tpu_custom_call.1} parent=1 // pred_check_branch
      %54 = sbr.rel (0) target = $region17
    $region16: #{tpu_custom_call.1} parent=1 // pred_region
      _
    $region17: #{tpu_custom_call.1} parent=1 // pred_fallthru
      _
    // Predicated region
    $region18: #{tpu_custom_call.1} parent=1 // pred_check
      _
    $region19: #{tpu_custom_call.1} parent=1 // pred_check_branch
      %56 = sbr.rel (0) target = $region21
    $region20: #{tpu_custom_call.1} parent=1 // pred_region
      _
    $region21: #{tpu_custom_call.1} parent=1 // pred_fallthru
      _
    // Predicated region
    $region22: #{tpu_custom_call.1} parent=1 // pred_check
      _
    $region23: #{tpu_custom_call.1} parent=1 // pred_check_branch
      %58 = sbr.rel (0) target = $region25
    $region24: #{tpu_custom_call.1} parent=1 // pred_region
      _
    $region25: #{tpu_custom_call.1} parent=1 // pred_fallthru
      _
    // Predicated region
    $region26: #{tpu_custom_call.1} parent=1 // pred_check
      _
    $region27: #{tpu_custom_call.1} parent=1 // pred_check_branch
      %60 = sbr.rel (0) target = $region29
    $region28: #{tpu_custom_call.1} parent=1 // pred_region
      _
    $region29: #{tpu_custom_call.1} parent=1 // pred_fallthru
      _
    // Predicated region
    $region30: #{tpu_custom_call.1} parent=1 // pred_check
      _
    $region31: #{tpu_custom_call.1} parent=1 // pred_check_branch
      %62 = sbr.rel (0) target = $region33
    $region32: #{tpu_custom_call.1} parent=1 // pred_region
      _
    $region33: #{tpu_custom_call.1} parent=1 // pred_fallthru
      _
    // Predicated region
    $region34: #{tpu_custom_call.1} parent=1 // pred_check
      _
    $region35: #{tpu_custom_call.1} parent=1 // pred_check_branch
      %64 = sbr.rel (0) target = $region37
    $region36: #{tpu_custom_call.1} parent=1 // pred_region
      _
    $region37: #{tpu_custom_call.1} parent=1 // pred_fallthru
      _
    // Predicated region
    $region38: #{tpu_custom_call.1} parent=1 // pred_check
      _
    $region39: #{tpu_custom_call.1} parent=1 // pred_check_branch
      %66 = sbr.rel (0) target = $region41
    $region40: #{tpu_custom_call.1} parent=1 // pred_region
      _
    $region41: #{tpu_custom_call.1} parent=1 // pred_fallthru
      _
    // Predicated region
    $region42: #{tpu_custom_call.1} parent=1 // pred_check
      _
    $region43: #{tpu_custom_call.1} parent=1 // pred_check_branch
      %68 = sbr.rel (0) target = $region45
    $region44: #{tpu_custom_call.1} parent=1 // pred_region
      _
    $region45: #{tpu_custom_call.1} parent=1 // pred_fallthru
      _
    // Predicated region
    $region46: #{tpu_custom_call.1} parent=1 // pred_check
      _
    $region47: #{tpu_custom_call.1} parent=1 // pred_check_branch
      %70 = sbr.rel (0) target = $region49
    $region48: #{tpu_custom_call.1} parent=1 // pred_region
      _
    $region49: #{tpu_custom_call.1} parent=1 // pred_fallthru
      _
    // Predicated region
    $region50: #{tpu_custom_call.1} parent=1 // pred_check
      _
    $region51: #{tpu_custom_call.1} parent=1 // pred_check_branch
      %72 = sbr.rel (0) target = $region53
    $region52: #{tpu_custom_call.1} parent=1 // pred_region
      _
    $region53: #{tpu_custom_call.1} parent=1 // pred_fallthru
      _
    // Predicated region
    $region54: #{tpu_custom_call.1} parent=1 // pred_check
      _
    $region55: #{tpu_custom_call.1} parent=1 // pred_check_branch
      %74 = sbr.rel (0) target = $region57
    $region56: #{tpu_custom_call.1} parent=1 // pred_region
      _
    $region57: #{tpu_custom_call.1} parent=1 // pred_fallthru
      _
    // Predicated region
    $region58: #{tpu_custom_call.1} parent=1 // pred_check
      _
    $region59: #{tpu_custom_call.1} parent=1 // pred_check_branch
      %76 = sbr.rel (0) target = $region61
    $region60: #{tpu_custom_call.1} parent=1 // pred_region
      %s78 = ssub.s32 512, 512
      %79 = vsyncadd [#allocation6], %s78
      %s80 = sshll.u32 [#allocation7], 4
      %s81 = int_to_ptr.vmem [resolvable:$true] %s80
      %86 = dma.hbm_to_vmem [thread:$0]  %s14, 512, %s81, [#allocation6], 128, 128, 8
    $region61: #{tpu_custom_call.1} parent=1 // pred_fallthru
      _
    // Predicated region
    $region62: #{tpu_custom_call.1} parent=1 // pred_check
      _
    $region63: #{tpu_custom_call.1} parent=1 // pred_check_branch
      %88 = sbr.rel (0) target = $region65
    $region64: #{tpu_custom_call.1} parent=1 // pred_region
      _
    $region65: #{tpu_custom_call.1} parent=1 // pred_fallthru
      _
    // Predicated region
    $region66: #{tpu_custom_call.1} parent=1 // pred_check
      _
    $region67: #{tpu_custom_call.1} parent=1 // pred_check_branch
      %90 = sbr.rel (0) target = $region69
    $region68: #{tpu_custom_call.1} parent=1 // pred_region
      %91 = dma.done [#allocation3], 256
    $region69: #{tpu_custom_call.1} parent=1 // pred_fallthru
      _
    // Predicated region
    $region70: #{tpu_custom_call.1} parent=1 // pred_check
      _
    $region71: #{tpu_custom_call.1} parent=1 // pred_check_branch
      %93 = sbr.rel (0) target = $region73
    $region72: #{tpu_custom_call.1} parent=1 // pred_region
      %94 = dma.done [#allocation6], 256
    $region73: #{tpu_custom_call.1} parent=1 // pred_fallthru
      _
    // Predicated region
    $region74: #{tpu_custom_call.1} parent=1 // pred_check
      _
    $region75: #{tpu_custom_call.1} parent=1 // pred_check_branch
      %96 = sbr.rel (0) target = $region77
    $region76: #{tpu_custom_call.1} parent=1 // pred_region
      %97 = dma.done [#allocation6], 512
    $region77: #{tpu_custom_call.1} parent=1 // pred_fallthru
      _
    %v98 = vld [vmem:[#allocation2] sm:$0xff]
    %v99 = vld [vmem:[#allocation2 + $0x8] sm:$0xff]
    %v100 = vld [vmem:[#allocation5] sm:$0xff]
    %v101 = vld [vmem:[#allocation5 + $0x8] sm:$0xff]
    %v102 = vld [vmem:[%s2] sm:$0xff]
    %v103 = vld [vmem:[%s2 + $0x8] sm:$0xff]
    %v104 = vld [vmem:[%s2 + $0x10] sm:$0xff]
    %v105 = vld [vmem:[%s2 + $0x18] sm:$0xff]
    %v106 = vld [vmem:[%s3] sm:$0x1]
    %v108 = vlaneseq
    %v109 = vshrl.u32 %v108, 7
    %v110 = vsub.s32 0, %v109
    %v111 = vrot.slane %v106, %v110
    %vm113 = vcmask 261120
    %v115 = vsel %vm113, %v98, 0
    %v118 = vsel %vm113, %v99, 0
    %120 = vmatprep.subr.mxu0 0.0
    %121 = vmatpush1.msra.mxu0 %v102
    %122 = vmatprep.subr.mxu0 0.0
    %123 = vmatpush1.msra.mxu0 %v103
    %124 = vmatprep.subr.mxu0 0.0
    %125 = vmatpush1.msra.mxu0 %v104
    %126 = vmatprep.subr.mxu0 0.0
    %127 = vmatpush1.msra.mxu0 %v105
    %128 = vmatprep.subr.mxu0 0.0
    %129 = vmatpush1.msra.mxu0 0.0
    %130 = vmatprep.subr.mxu0 0.0
    %131 = vmatpush1.msra.mxu0 0.0
    %132 = vmatprep.subr.mxu0 0.0
    %133 = vmatpush1.msra.mxu0 0.0
    %134 = vmatprep.subr.mxu0 0.0
    %135 = vmatpush1.msra.mxu0 0.0
    %136 = vmatprep.subr.mxu0 0.0
    %137 = vmatpush1.msra.mxu0 0.0
    %138 = vmatprep.subr.mxu0 0.0
    %139 = vmatpush1.msra.mxu0 0.0
    %140 = vmatprep.subr.mxu0 0.0
    %141 = vmatpush1.msra.mxu0 0.0
    %142 = vmatprep.subr.mxu0 0.0
    %143 = vmatpush1.msra.mxu0 0.0
    %144 = vmatprep.subr.mxu0 0.0
    %145 = vmatpush1.msra.mxu0 0.0
    %146 = vmatprep.subr.mxu0 0.0
    %147 = vmatpush1.msra.mxu0 0.0
    %148 = vmatprep.subr.mxu0 0.0
    %149 = vmatpush1.msra.mxu0 0.0
    %150 = vmatprep.subr.mxu0 0.0
    %151 = vmatpush1.msra.mxu0 0.0
    %152 = vmatprep.subr.mxu0 0.0
    %153 = vmatpush1.msra.mxu0 0.0
    %154 = vmatprep.subr.mxu0 0.0
    %155 = vmatpush1.msra.mxu0 0.0
    %156 = vmatprep.subr.mxu0 0.0
    %157 = vmatpush1.msra.mxu0 0.0
    %158 = vmatprep.subr.mxu0 0.0
    %159 = vmatpush1.msra.mxu0 0.0
    %160 = vmatprep.subr.mxu0 0.0
    %161 = vmatpush1.msra.mxu0 0.0
    %162 = vmatprep.subr.mxu0 0.0
    %163 = vmatpush1.msra.mxu0 0.0
    %164 = vmatprep.subr.mxu0 0.0
    %165 = vmatpush1.msra.mxu0 0.0
    %166 = vmatprep.subr.mxu0 0.0
    %167 = vmatpush1.msra.mxu0 0.0
    %168 = vmatprep.subr.mxu0 0.0
    %169 = vmatpush1.msra.mxu0 0.0
    %170 = vmatprep.subr.mxu0 0.0
    %171 = vmatpush1.msra.mxu0 0.0
    %172 = vmatprep.subr.mxu0 0.0
    %173 = vmatpush1.msra.mxu0 0.0
    %174 = vmatprep.subr.mxu0 0.0
    %175 = vmatpush1.msra.mxu0 0.0
    %176 = vmatprep.subr.mxu0 0.0
    %177 = vmatpush1.msra.mxu0 0.0
    %178 = vmatprep.subr.mxu0 0.0
    %179 = vmatpush1.msra.mxu0 0.0
    %180 = vmatprep.subr.mxu0 0.0
    %181 = vmatpush1.msra.mxu0 0.0
    %182 = vmatprep.subr.mxu0 0.0
    %183 = vmatpush1.msra.mxu0 0.0
    %184 = vmatprep.mubr.f32.mxu0 0.0
    %185 = vmatmul.mubr.f32.gmra.mrb[0].mxu0 %v115
    %v186 = vpop.f32.mrb[0].mxu0
    %v187 = vadd.f32 %v111, %v186
    %v188 = vpop.f32.mrb[0].mxu0
    %189 = vmatprep.mubr.f32.mxu0 0.0
    %190 = vmatmul.mubr.f32.gmra.mrb[0].mxu0 %v118
    %v191 = vpop.f32.mrb[0].mxu0
    %v192 = vadd.f32 %v111, %v191
    %v193 = vpop.f32.mrb[0].mxu0
    %194 = vdwg.mxu0
    %197 = vrot.lane.b32.xlu0 %v187, 96
    %v198 = vpop.permute.xlu0 %197
    %199 = vrot.lane.b32.xlu0 %v192, 96
    %v200 = vpop.permute.xlu0 %199
    %vm201 = vcmask 64512
    %v202 = vsel %vm201, %v187, 0
    %v204 = vsel %vm201, %v192, 0
    %v206 = vsel %vm201, %v198, 0
    %v208 = vsel %vm201, %v200, 0
    %210 = vmatprep.subr.mxu0 0.0
    %211 = vmatpush1.xpose.msra.mxu0 %v206
    %212 = vmatprep.subr.mxu0 0.0
    %213 = vmatpush1.xpose.msra.mxu0 %v208
    %214 = vmatprep.subr.mxu0 0.0
    %215 = vmatpush1.xpose.msra.mxu0 0.0
    %216 = vmatprep.subr.mxu0 0.0
    %217 = vmatpush1.xpose.msra.mxu0 0.0
    %218 = vmatprep.subr.mxu0 0.0
    %219 = vmatpush1.xpose.msra.mxu0 0.0
    %220 = vmatprep.subr.mxu0 0.0
    %221 = vmatpush1.xpose.msra.mxu0 0.0
    %222 = vmatprep.subr.mxu0 0.0
    %223 = vmatpush1.xpose.msra.mxu0 0.0
    %224 = vmatprep.subr.mxu0 0.0
    %225 = vmatpush1.xpose.msra.mxu0 0.0
    %226 = vmatprep.subr.mxu0 0.0
    %227 = vmatpush1.xpose.msra.mxu0 0.0
    %228 = vmatprep.subr.mxu0 0.0
    %229 = vmatpush1.xpose.msra.mxu0 0.0
    %230 = vmatprep.subr.mxu0 0.0
    %231 = vmatpush1.xpose.msra.mxu0 0.0
    %232 = vmatprep.subr.mxu0 0.0
    %233 = vmatpush1.xpose.msra.mxu0 0.0
    %234 = vmatprep.subr.mxu0 0.0
    %235 = vmatpush1.xpose.msra.mxu0 0.0
    %236 = vmatprep.subr.mxu0 0.0
    %237 = vmatpush1.xpose.msra.mxu0 0.0
    %238 = vmatprep.subr.mxu0 0.0
    %239 = vmatpush1.xpose.msra.mxu0 0.0
    %240 = vmatprep.subr.mxu0 0.0
    %241 = vmatpush1.xpose.msra.mxu0 0.0
    %242 = vmatprep.subr.mxu0 0.0
    %243 = vmatpush1.xpose.msra.mxu0 0.0
    %244 = vmatprep.subr.mxu0 0.0
    %245 = vmatpush1.xpose.msra.mxu0 0.0
    %246 = vmatprep.subr.mxu0 0.0
    %247 = vmatpush1.xpose.msra.mxu0 0.0
    %248 = vmatprep.subr.mxu0 0.0
    %249 = vmatpush1.xpose.msra.mxu0 0.0
    %250 = vmatprep.subr.mxu0 0.0
    %251 = vmatpush1.xpose.msra.mxu0 0.0
    %252 = vmatprep.subr.mxu0 0.0
    %253 = vmatpush1.xpose.msra.mxu0 0.0
    %254 = vmatprep.subr.mxu0 0.0
    %255 = vmatpush1.xpose.msra.mxu0 0.0
    %256 = vmatprep.subr.mxu0 0.0
    %257 = vmatpush1.xpose.msra.mxu0 0.0
    %258 = vmatprep.subr.mxu0 0.0
    %259 = vmatpush1.xpose.msra.mxu0 0.0
    %260 = vmatprep.subr.mxu0 0.0
    %261 = vmatpush1.xpose.msra.mxu0 0.0
    %262 = vmatprep.subr.mxu0 0.0
    %263 = vmatpush1.xpose.msra.mxu0 0.0
    %264 = vmatprep.subr.mxu0 0.0
    %265 = vmatpush1.xpose.msra.mxu0 0.0
    %266 = vmatprep.subr.mxu0 0.0
    %267 = vmatpush1.xpose.msra.mxu0 0.0
    %268 = vmatprep.subr.mxu0 0.0
    %269 = vmatpush1.xpose.msra.mxu0 0.0
    %270 = vmatprep.subr.mxu0 0.0
    %271 = vmatpush1.xpose.msra.mxu0 0.0
    %272 = vmatprep.subr.mxu0 0.0
    %273 = vmatpush1.xpose.msra.mxu0 0.0
    %274 = vmatprep.mubr.f32.mxu0 0.0
    %275 = vmatmul.mubr.f32.gmra.mrb[0].mxu0 %v202
    %v276 = vpop.f32.mrb[0].mxu0
    %v277 = vadd.f32 0.0, %v276
    %v278 = vpop.f32.mrb[0].mxu0
    %279 = vmatprep.mubr.f32.mxu0 0.0
    %280 = vmatmul.mubr.f32.gmra.mrb[0].mxu0 %v204
    %v281 = vpop.f32.mrb[0].mxu0
    %v282 = vadd.f32 0.0, %v281
    %v283 = vpop.f32.mrb[0].mxu0
    %284 = vdwg.mxu0
    %v285 = vmul.f32 %v277, 0.35355338
    %v286 = vmul.f32 %v282, 0.35355338
    %v287 = vadd.f32 %v285, %v100
    %v288 = vadd.f32 %v286, %v101
    %vm289 = vcmask 130048
    %v290 = vsel %vm289, %v287, -inf
    %291 = vmax.xlane.f32.xlu0 %v290
    %v292 = vpop.xlane.xlu0 %291
    %v293 = vsel %vm289, %v288, -inf
    %294 = vmax.xlane.f32.xlu0 %v293
    %v295 = vpop.xlane.xlu0 %294
    %v296 = vsub.f32 %v287, %v292
    %v297 = vsub.f32 %v288, %v295
    %v298 = vmul.f32 %v296, 1.442695
    %v299 = vpow.pop %v298
    %v300 = vmul.f32 %v297, 1.442695
    %v301 = vpow.pop %v300
    %v302 = vsel %vm289, %v299, 0.0
    %303 = vadd.xlane.f32.xlu0 %v302
    %v304 = vpop.xlane.xlu0 %303
    %v305 = vsel %vm289, %v301, 0.0
    %306 = vadd.xlane.f32.xlu0 %v305
    %v307 = vpop.xlane.xlu0 %306
    %v308 = vrcp.pop %v304
    %v309 = vrcp.pop %v307
    %v310 = vmul.f32 %v299, %v308
    %v311 = vmul.f32 %v301, %v309
    %312 = vrot.lane.b32.xlu0 %v187, 64
    %v313 = vpop.permute.xlu0 %312
    %314 = vrot.lane.b32.xlu0 %v192, 64
    %v315 = vpop.permute.xlu0 %314
    %v319 = vsel %vm289, %v310, 0
    %v322 = vsel %vm289, %v311, 0
    %324 = vmatprep.subr.mxu0 0.0
    %325 = vmatpush1.msra.mxu0 %v313
    %326 = vmatprep.subr.mxu0 0.0
    %327 = vmatpush1.msra.mxu0 %v315
    %328 = vmatprep.subr.mxu0 0.0
    %329 = vmatpush1.msra.mxu0 0.0
    %330 = vmatprep.subr.mxu0 0.0
    %331 = vmatpush1.msra.mxu0 0.0
    %332 = vmatprep.subr.mxu0 0.0
    %333 = vmatpush1.msra.mxu0 0.0
    %334 = vmatprep.subr.mxu0 0.0
    %335 = vmatpush1.msra.mxu0 0.0
    %336 = vmatprep.subr.mxu0 0.0
    %337 = vmatpush1.msra.mxu0 0.0
    %338 = vmatprep.subr.mxu0 0.0
    %339 = vmatpush1.msra.mxu0 0.0
    %340 = vmatprep.subr.mxu0 0.0
    %341 = vmatpush1.msra.mxu0 0.0
    %342 = vmatprep.subr.mxu0 0.0
    %343 = vmatpush1.msra.mxu0 0.0
    %344 = vmatprep.subr.mxu0 0.0
    %345 = vmatpush1.msra.mxu0 0.0
    %346 = vmatprep.subr.mxu0 0.0
    %347 = vmatpush1.msra.mxu0 0.0
    %348 = vmatprep.subr.mxu0 0.0
    %349 = vmatpush1.msra.mxu0 0.0
    %350 = vmatprep.subr.mxu0 0.0
    %351 = vmatpush1.msra.mxu0 0.0
    %352 = vmatprep.subr.mxu0 0.0
    %353 = vmatpush1.msra.mxu0 0.0
    %354 = vmatprep.subr.mxu0 0.0
    %355 = vmatpush1.msra.mxu0 0.0
    %356 = vmatprep.subr.mxu0 0.0
    %357 = vmatpush1.msra.mxu0 0.0
    %358 = vmatprep.subr.mxu0 0.0
    %359 = vmatpush1.msra.mxu0 0.0
    %360 = vmatprep.subr.mxu0 0.0
    %361 = vmatpush1.msra.mxu0 0.0
    %362 = vmatprep.subr.mxu0 0.0
    %363 = vmatpush1.msra.mxu0 0.0
    %364 = vmatprep.subr.mxu0 0.0
    %365 = vmatpush1.msra.mxu0 0.0
    %366 = vmatprep.subr.mxu0 0.0
    %367 = vmatpush1.msra.mxu0 0.0
    %368 = vmatprep.subr.mxu0 0.0
    %369 = vmatpush1.msra.mxu0 0.0
    %370 = vmatprep.subr.mxu0 0.0
    %371 = vmatpush1.msra.mxu0 0.0
    %372 = vmatprep.subr.mxu0 0.0
    %373 = vmatpush1.msra.mxu0 0.0
    %374 = vmatprep.subr.mxu0 0.0
    %375 = vmatpush1.msra.mxu0 0.0
    %376 = vmatprep.subr.mxu0 0.0
    %377 = vmatpush1.msra.mxu0 0.0
    %378 = vmatprep.subr.mxu0 0.0
    %379 = vmatpush1.msra.mxu0 0.0
    %380 = vmatprep.subr.mxu0 0.0
    %381 = vmatpush1.msra.mxu0 0.0
    %382 = vmatprep.subr.mxu0 0.0
    %383 = vmatpush1.msra.mxu0 0.0
    %384 = vmatprep.subr.mxu0 0.0
    %385 = vmatpush1.msra.mxu0 0.0
    %386 = vmatprep.subr.mxu0 0.0
    %387 = vmatpush1.msra.mxu0 0.0
    %388 = vmatprep.mubr.f32.mxu0 0.0
    %389 = vmatmul.mubr.f32.gmra.mrb[0].mxu0 %v319
    %v390 = vpop.f32.mrb[0].mxu0
    %v391 = vadd.f32 0.0, %v390
    %v392 = vpop.f32.mrb[0].mxu0
    %393 = vmatprep.mubr.f32.mxu0 0.0
    %394 = vmatmul.mubr.f32.gmra.mrb[0].mxu0 %v322
    %v395 = vpop.f32.mrb[0].mxu0
    %v396 = vadd.f32 0.0, %v395
    %v397 = vpop.f32.mrb[0].mxu0
    %398 = vdwg.mxu0
    %399 = vrot.lane.b32.xlu0 %v311, 120
    %v400 = vpop.permute.xlu0 %399
    %402 = vrot.lane.b32.xlu0 %v187, 120
    %v403 = vpop.permute.xlu0 %402
    %404 = vrot.lane.b32.xlu0 %v192, 120
    %v405 = vpop.permute.xlu0 %404
    %406 = vrot.lane.b32.xlu0 %v187, 88
    %v407 = vpop.permute.xlu0 %406
    %408 = vrot.lane.b32.xlu0 %v192, 88
    %v409 = vpop.permute.xlu0 %408
    %v410 = vsel %vm201, %v403, 0
    %v412 = vsel %vm201, %v405, 0
    %v414 = vsel %vm201, %v407, 0
    %v416 = vsel %vm201, %v409, 0
    %418 = vmatprep.subr.mxu0 0.0
    %419 = vmatpush1.xpose.msra.mxu0 %v414
    %420 = vmatprep.subr.mxu0 0.0
    %421 = vmatpush1.xpose.msra.mxu0 %v416
    %422 = vmatprep.subr.mxu0 0.0
    %423 = vmatpush1.xpose.msra.mxu0 0.0
    %424 = vmatprep.subr.mxu0 0.0
    %425 = vmatpush1.xpose.msra.mxu0 0.0
    %426 = vmatprep.subr.mxu0 0.0
    %427 = vmatpush1.xpose.msra.mxu0 0.0
    %428 = vmatprep.subr.mxu0 0.0
    %429 = vmatpush1.xpose.msra.mxu0 0.0
    %430 = vmatprep.subr.mxu0 0.0
    %431 = vmatpush1.xpose.msra.mxu0 0.0
    %432 = vmatprep.subr.mxu0 0.0
    %433 = vmatpush1.xpose.msra.mxu0 0.0
    %434 = vmatprep.subr.mxu0 0.0
    %435 = vmatpush1.xpose.msra.mxu0 0.0
    %436 = vmatprep.subr.mxu0 0.0
    %437 = vmatpush1.xpose.msra.mxu0 0.0
    %438 = vmatprep.subr.mxu0 0.0
    %439 = vmatpush1.xpose.msra.mxu0 0.0
    %440 = vmatprep.subr.mxu0 0.0
    %441 = vmatpush1.xpose.msra.mxu0 0.0
    %442 = vmatprep.subr.mxu0 0.0
    %443 = vmatpush1.xpose.msra.mxu0 0.0
    %444 = vmatprep.subr.mxu0 0.0
    %445 = vmatpush1.xpose.msra.mxu0 0.0
    %446 = vmatprep.subr.mxu0 0.0
    %447 = vmatpush1.xpose.msra.mxu0 0.0
    %448 = vmatprep.subr.mxu0 0.0
    %449 = vmatpush1.xpose.msra.mxu0 0.0
    %450 = vmatprep.subr.mxu0 0.0
    %451 = vmatpush1.xpose.msra.mxu0 0.0
    %452 = vmatprep.subr.mxu0 0.0
    %453 = vmatpush1.xpose.msra.mxu0 0.0
    %454 = vmatprep.subr.mxu0 0.0
    %455 = vmatpush1.xpose.msra.mxu0 0.0
    %456 = vmatprep.subr.mxu0 0.0
    %457 = vmatpush1.xpose.msra.mxu0 0.0
    %458 = vmatprep.subr.mxu0 0.0
    %459 = vmatpush1.xpose.msra.mxu0 0.0
    %460 = vmatprep.subr.mxu0 0.0
    %461 = vmatpush1.xpose.msra.mxu0 0.0
    %462 = vmatprep.subr.mxu0 0.0
    %463 = vmatpush1.xpose.msra.mxu0 0.0
    %464 = vmatprep.subr.mxu0 0.0
    %465 = vmatpush1.xpose.msra.mxu0 0.0
    %466 = vmatprep.subr.mxu0 0.0
    %467 = vmatpush1.xpose.msra.mxu0 0.0
    %468 = vmatprep.subr.mxu0 0.0
    %469 = vmatpush1.xpose.msra.mxu0 0.0
    %470 = vmatprep.subr.mxu0 0.0
    %471 = vmatpush1.xpose.msra.mxu0 0.0
    %472 = vmatprep.subr.mxu0 0.0
    %473 = vmatpush1.xpose.msra.mxu0 0.0
    %474 = vmatprep.subr.mxu0 0.0
    %475 = vmatpush1.xpose.msra.mxu0 0.0
    %476 = vmatprep.subr.mxu0 0.0
    %477 = vmatpush1.xpose.msra.mxu0 0.0
    %478 = vmatprep.subr.mxu0 0.0
    %479 = vmatpush1.xpose.msra.mxu0 0.0
    %480 = vmatprep.subr.mxu0 0.0
    %481 = vmatpush1.xpose.msra.mxu0 0.0
    %482 = vmatprep.mubr.f32.mxu0 0.0
    %483 = vmatmul.mubr.f32.gmra.mrb[0].mxu0 %v410
    %v484 = vpop.f32.mrb[0].mxu0
    %v485 = vadd.f32 0.0, %v484
    %v486 = vpop.f32.mrb[0].mxu0
    %487 = vmatprep.mubr.f32.mxu0 0.0
    %488 = vmatmul.mubr.f32.gmra.mrb[0].mxu0 %v412
    %v489 = vpop.f32.mrb[0].mxu0
    %v490 = vadd.f32 0.0, %v489
    %v491 = vpop.f32.mrb[0].mxu0
    %492 = vdwg.mxu0
    %v493 = vmul.f32 %v485, 0.35355338
    %v494 = vmul.f32 %v490, 0.35355338
    %v495 = vadd.f32 %v493, %v100
    %v496 = vadd.f32 %v494, %v101
    %v497 = vsel %vm289, %v495, -inf
    %498 = vmax.xlane.f32.xlu0 %v497
    %v499 = vpop.xlane.xlu0 %498
    %v500 = vsel %vm289, %v496, -inf
    %501 = vmax.xlane.f32.xlu0 %v500
    %v502 = vpop.xlane.xlu0 %501
    %v503 = vsub.f32 %v495, %v499
    %v504 = vsub.f32 %v496, %v502
    %v505 = vmul.f32 %v503, 1.442695
    %v506 = vpow.pop %v505
    %v507 = vmul.f32 %v504, 1.442695
    %v508 = vpow.pop %v507
    %v509 = vsel %vm289, %v506, 0.0
    %510 = vadd.xlane.f32.xlu0 %v509
    %v511 = vpop.xlane.xlu0 %510
    %v512 = vsel %vm289, %v508, 0.0
    %513 = vadd.xlane.f32.xlu0 %v512
    %v514 = vpop.xlane.xlu0 %513
    %v515 = vrcp.pop %v511
    %v516 = vrcp.pop %v514
    %v517 = vmul.f32 %v506, %v515
    %v518 = vmul.f32 %v508, %v516
    %519 = vrot.lane.b32.xlu0 %v187, 56
    %v520 = vpop.permute.xlu0 %519
    %521 = vrot.lane.b32.xlu0 %v192, 56
    %v522 = vpop.permute.xlu0 %521
    %v526 = vsel %vm289, %v517, 0
    %v529 = vsel %vm289, %v518, 0
    %531 = vmatprep.subr.mxu0 0.0
    %532 = vmatpush1.msra.mxu0 %v520
    %533 = vmatprep.subr.mxu0 0.0
    %534 = vmatpush1.msra.mxu0 %v522
    %535 = vmatprep.subr.mxu0 0.0
    %536 = vmatpush1.msra.mxu0 0.0
    %537 = vmatprep.subr.mxu0 0.0
    %538 = vmatpush1.msra.mxu0 0.0
    %539 = vmatprep.subr.mxu0 0.0
    %540 = vmatpush1.msra.mxu0 0.0
    %541 = vmatprep.subr.mxu0 0.0
    %542 = vmatpush1.msra.mxu0 0.0
    %543 = vmatprep.subr.mxu0 0.0
    %544 = vmatpush1.msra.mxu0 0.0
    %545 = vmatprep.subr.mxu0 0.0
    %546 = vmatpush1.msra.mxu0 0.0
    %547 = vmatprep.subr.mxu0 0.0
    %548 = vmatpush1.msra.mxu0 0.0
    %549 = vmatprep.subr.mxu0 0.0
    %550 = vmatpush1.msra.mxu0 0.0
    %551 = vmatprep.subr.mxu0 0.0
    %552 = vmatpush1.msra.mxu0 0.0
    %553 = vmatprep.subr.mxu0 0.0
    %554 = vmatpush1.msra.mxu0 0.0
    %555 = vmatprep.subr.mxu0 0.0
    %556 = vmatpush1.msra.mxu0 0.0
    %557 = vmatprep.subr.mxu0 0.0
    %558 = vmatpush1.msra.mxu0 0.0
    %559 = vmatprep.subr.mxu0 0.0
    %560 = vmatpush1.msra.mxu0 0.0
    %561 = vmatprep.subr.mxu0 0.0
    %562 = vmatpush1.msra.mxu0 0.0
    %563 = vmatprep.subr.mxu0 0.0
    %564 = vmatpush1.msra.mxu0 0.0
    %565 = vmatprep.subr.mxu0 0.0
    %566 = vmatpush1.msra.mxu0 0.0
    %567 = vmatprep.subr.mxu0 0.0
    %568 = vmatpush1.msra.mxu0 0.0
    %569 = vmatprep.subr.mxu0 0.0
    %570 = vmatpush1.msra.mxu0 0.0
    %571 = vmatprep.subr.mxu0 0.0
    %572 = vmatpush1.msra.mxu0 0.0
    %573 = vmatprep.subr.mxu0 0.0
    %574 = vmatpush1.msra.mxu0 0.0
    %575 = vmatprep.subr.mxu0 0.0
    %576 = vmatpush1.msra.mxu0 0.0
    %577 = vmatprep.subr.mxu0 0.0
    %578 = vmatpush1.msra.mxu0 0.0
    %579 = vmatprep.subr.mxu0 0.0
    %580 = vmatpush1.msra.mxu0 0.0
    %581 = vmatprep.subr.mxu0 0.0
    %582 = vmatpush1.msra.mxu0 0.0
    %583 = vmatprep.subr.mxu0 0.0
    %584 = vmatpush1.msra.mxu0 0.0
    %585 = vmatprep.subr.mxu0 0.0
    %586 = vmatpush1.msra.mxu0 0.0
    %587 = vmatprep.subr.mxu0 0.0
    %588 = vmatpush1.msra.mxu0 0.0
    %589 = vmatprep.subr.mxu0 0.0
    %590 = vmatpush1.msra.mxu0 0.0
    %591 = vmatprep.subr.mxu0 0.0
    %592 = vmatpush1.msra.mxu0 0.0
    %593 = vmatprep.subr.mxu0 0.0
    %594 = vmatpush1.msra.mxu0 0.0
    %595 = vmatprep.mubr.f32.mxu0 0.0
    %596 = vmatmul.mubr.f32.gmra.mrb[0].mxu0 %v526
    %v597 = vpop.f32.mrb[0].mxu0
    %v598 = vadd.f32 0.0, %v597
    %v599 = vpop.f32.mrb[0].mxu0
    %600 = vmatprep.mubr.f32.mxu0 0.0
    %601 = vmatmul.mubr.f32.gmra.mrb[0].mxu0 %v529
    %v602 = vpop.f32.mrb[0].mxu0
    %v603 = vadd.f32 0.0, %v602
    %v604 = vpop.f32.mrb[0].mxu0
    %605 = vdwg.mxu0
    %606 = vrot.lane.b32.xlu0 %v518, 120
    %v607 = vpop.permute.xlu0 %606
    %608 = vrot.lane.b32.xlu0 %v187, 112
    %v609 = vpop.permute.xlu0 %608
    %610 = vrot.lane.b32.xlu0 %v192, 112
    %v611 = vpop.permute.xlu0 %610
    %612 = vrot.lane.b32.xlu0 %v187, 80
    %v613 = vpop.permute.xlu0 %612
    %614 = vrot.lane.b32.xlu0 %v192, 80
    %v615 = vpop.permute.xlu0 %614
    %v616 = vsel %vm201, %v609, 0
    %v618 = vsel %vm201, %v611, 0
    %v620 = vsel %vm201, %v613, 0
    %v622 = vsel %vm201, %v615, 0
    %624 = vmatprep.subr.mxu0 0.0
    %625 = vmatpush1.xpose.msra.mxu0 %v620
    %626 = vmatprep.subr.mxu0 0.0
    %627 = vmatpush1.xpose.msra.mxu0 %v622
    %628 = vmatprep.subr.mxu0 0.0
    %629 = vmatpush1.xpose.msra.mxu0 0.0
    %630 = vmatprep.subr.mxu0 0.0
    %631 = vmatpush1.xpose.msra.mxu0 0.0
    %632 = vmatprep.subr.mxu0 0.0
    %633 = vmatpush1.xpose.msra.mxu0 0.0
    %634 = vmatprep.subr.mxu0 0.0
    %635 = vmatpush1.xpose.msra.mxu0 0.0
    %636 = vmatprep.subr.mxu0 0.0
    %637 = vmatpush1.xpose.msra.mxu0 0.0
    %638 = vmatprep.subr.mxu0 0.0
    %639 = vmatpush1.xpose.msra.mxu0 0.0
    %640 = vmatprep.subr.mxu0 0.0
    %641 = vmatpush1.xpose.msra.mxu0 0.0
    %642 = vmatprep.subr.mxu0 0.0
    %643 = vmatpush1.xpose.msra.mxu0 0.0
    %644 = vmatprep.subr.mxu0 0.0
    %645 = vmatpush1.xpose.msra.mxu0 0.0
    %646 = vmatprep.subr.mxu0 0.0
    %647 = vmatpush1.xpose.msra.mxu0 0.0
    %648 = vmatprep.subr.mxu0 0.0
    %649 = vmatpush1.xpose.msra.mxu0 0.0
    %650 = vmatprep.subr.mxu0 0.0
    %651 = vmatpush1.xpose.msra.mxu0 0.0
    %652 = vmatprep.subr.mxu0 0.0
    %653 = vmatpush1.xpose.msra.mxu0 0.0
    %654 = vmatprep.subr.mxu0 0.0
    %655 = vmatpush1.xpose.msra.mxu0 0.0
    %656 = vmatprep.subr.mxu0 0.0
    %657 = vmatpush1.xpose.msra.mxu0 0.0
    %658 = vmatprep.subr.mxu0 0.0
    %659 = vmatpush1.xpose.msra.mxu0 0.0
    %660 = vmatprep.subr.mxu0 0.0
    %661 = vmatpush1.xpose.msra.mxu0 0.0
    %662 = vmatprep.subr.mxu0 0.0
    %663 = vmatpush1.xpose.msra.mxu0 0.0
    %664 = vmatprep.subr.mxu0 0.0
    %665 = vmatpush1.xpose.msra.mxu0 0.0
    %666 = vmatprep.subr.mxu0 0.0
    %667 = vmatpush1.xpose.msra.mxu0 0.0
    %668 = vmatprep.subr.mxu0 0.0
    %669 = vmatpush1.xpose.msra.mxu0 0.0
    %670 = vmatprep.subr.mxu0 0.0
    %671 = vmatpush1.xpose.msra.mxu0 0.0
    %672 = vmatprep.subr.mxu0 0.0
    %673 = vmatpush1.xpose.msra.mxu0 0.0
    %674 = vmatprep.subr.mxu0 0.0
    %675 = vmatpush1.xpose.msra.mxu0 0.0
    %676 = vmatprep.subr.mxu0 0.0
    %677 = vmatpush1.xpose.msra.mxu0 0.0
    %678 = vmatprep.subr.mxu0 0.0
    %679 = vmatpush1.xpose.msra.mxu0 0.0
    %680 = vmatprep.subr.mxu0 0.0
    %681 = vmatpush1.xpose.msra.mxu0 0.0
    %682 = vmatprep.subr.mxu0 0.0
    %683 = vmatpush1.xpose.msra.mxu0 0.0
    %684 = vmatprep.subr.mxu0 0.0
    %685 = vmatpush1.xpose.msra.mxu0 0.0
    %686 = vmatprep.subr.mxu0 0.0
    %687 = vmatpush1.xpose.msra.mxu0 0.0
    %688 = vmatprep.mubr.f32.mxu0 0.0
    %689 = vmatmul.mubr.f32.gmra.mrb[0].mxu0 %v616
    %v690 = vpop.f32.mrb[0].mxu0
    %v691 = vadd.f32 0.0, %v690
    %v692 = vpop.f32.mrb[0].mxu0
    %693 = vmatprep.mubr.f32.mxu0 0.0
    %694 = vmatmul.mubr.f32.gmra.mrb[0].mxu0 %v618
    %v695 = vpop.f32.mrb[0].mxu0
    %v696 = vadd.f32 0.0, %v695
    %v697 = vpop.f32.mrb[0].mxu0
    %698 = vdwg.mxu0
    %v699 = vmul.f32 %v691, 0.35355338
    %v700 = vmul.f32 %v696, 0.35355338
    %v701 = vadd.f32 %v699, %v100
    %v702 = vadd.f32 %v700, %v101
    %v703 = vsel %vm289, %v701, -inf
    %704 = vmax.xlane.f32.xlu0 %v703
    %v705 = vpop.xlane.xlu0 %704
    %v706 = vsel %vm289, %v702, -inf
    %707 = vmax.xlane.f32.xlu0 %v706
    %v708 = vpop.xlane.xlu0 %707
    %v709 = vsub.f32 %v701, %v705
    %v710 = vsub.f32 %v702, %v708
    %v711 = vmul.f32 %v709, 1.442695
    %v712 = vpow.pop %v711
    %v713 = vmul.f32 %v710, 1.442695
    %v714 = vpow.pop %v713
    %v715 = vsel %vm289, %v712, 0.0
    %716 = vadd.xlane.f32.xlu0 %v715
    %v717 = vpop.xlane.xlu0 %716
    %v718 = vsel %vm289, %v714, 0.0
    %719 = vadd.xlane.f32.xlu0 %v718
    %v720 = vpop.xlane.xlu0 %719
    %v721 = vrcp.pop %v717
    %v722 = vrcp.pop %v720
    %v723 = vmul.f32 %v712, %v721
    %v724 = vmul.f32 %v714, %v722
    %725 = vrot.lane.b32.xlu0 %v187, 48
    %v726 = vpop.permute.xlu0 %725
    %727 = vrot.lane.b32.xlu0 %v192, 48
    %v728 = vpop.permute.xlu0 %727
    %v732 = vsel %vm289, %v723, 0
    %v735 = vsel %vm289, %v724, 0
    %737 = vmatprep.subr.mxu0 0.0
    %738 = vmatpush1.msra.mxu0 %v726
    %739 = vmatprep.subr.mxu0 0.0
    %740 = vmatpush1.msra.mxu0 %v728
    %741 = vmatprep.subr.mxu0 0.0
    %742 = vmatpush1.msra.mxu0 0.0
    %743 = vmatprep.subr.mxu0 0.0
    %744 = vmatpush1.msra.mxu0 0.0
    %745 = vmatprep.subr.mxu0 0.0
    %746 = vmatpush1.msra.mxu0 0.0
    %747 = vmatprep.subr.mxu0 0.0
    %748 = vmatpush1.msra.mxu0 0.0
    %749 = vmatprep.subr.mxu0 0.0
    %750 = vmatpush1.msra.mxu0 0.0
    %751 = vmatprep.subr.mxu0 0.0
    %752 = vmatpush1.msra.mxu0 0.0
    %753 = vmatprep.subr.mxu0 0.0
    %754 = vmatpush1.msra.mxu0 0.0
    %755 = vmatprep.subr.mxu0 0.0
    %756 = vmatpush1.msra.mxu0 0.0
    %757 = vmatprep.subr.mxu0 0.0
    %758 = vmatpush1.msra.mxu0 0.0
    %759 = vmatprep.subr.mxu0 0.0
    %760 = vmatpush1.msra.mxu0 0.0
    %761 = vmatprep.subr.mxu0 0.0
    %762 = vmatpush1.msra.mxu0 0.0
    %763 = vmatprep.subr.mxu0 0.0
    %764 = vmatpush1.msra.mxu0 0.0
    %765 = vmatprep.subr.mxu0 0.0
    %766 = vmatpush1.msra.mxu0 0.0
    %767 = vmatprep.subr.mxu0 0.0
    %768 = vmatpush1.msra.mxu0 0.0
    %769 = vmatprep.subr.mxu0 0.0
    %770 = vmatpush1.msra.mxu0 0.0
    %771 = vmatprep.subr.mxu0 0.0
    %772 = vmatpush1.msra.mxu0 0.0
    %773 = vmatprep.subr.mxu0 0.0
    %774 = vmatpush1.msra.mxu0 0.0
    %775 = vmatprep.subr.mxu0 0.0
    %776 = vmatpush1.msra.mxu0 0.0
    %777 = vmatprep.subr.mxu0 0.0
    %778 = vmatpush1.msra.mxu0 0.0
    %779 = vmatprep.subr.mxu0 0.0
    %780 = vmatpush1.msra.mxu0 0.0
    %781 = vmatprep.subr.mxu0 0.0
    %782 = vmatpush1.msra.mxu0 0.0
    %783 = vmatprep.subr.mxu0 0.0
    %784 = vmatpush1.msra.mxu0 0.0
    %785 = vmatprep.subr.mxu0 0.0
    %786 = vmatpush1.msra.mxu0 0.0
    %787 = vmatprep.subr.mxu0 0.0
    %788 = vmatpush1.msra.mxu0 0.0
    %789 = vmatprep.subr.mxu0 0.0
    %790 = vmatpush1.msra.mxu0 0.0
    %791 = vmatprep.subr.mxu0 0.0
    %792 = vmatpush1.msra.mxu0 0.0
    %793 = vmatprep.subr.mxu0 0.0
    %794 = vmatpush1.msra.mxu0 0.0
    %795 = vmatprep.subr.mxu0 0.0
    %796 = vmatpush1.msra.mxu0 0.0
    %797 = vmatprep.subr.mxu0 0.0
    %798 = vmatpush1.msra.mxu0 0.0
    %799 = vmatprep.subr.mxu0 0.0
    %800 = vmatpush1.msra.mxu0 0.0
    %801 = vmatprep.mubr.f32.mxu0 0.0
    %802 = vmatmul.mubr.f32.gmra.mrb[0].mxu0 %v732
    %v803 = vpop.f32.mrb[0].mxu0
    %v804 = vadd.f32 0.0, %v803
    %v805 = vpop.f32.mrb[0].mxu0
    %806 = vmatprep.mubr.f32.mxu0 0.0
    %807 = vmatmul.mubr.f32.gmra.mrb[0].mxu0 %v735
    %v808 = vpop.f32.mrb[0].mxu0
    %v809 = vadd.f32 0.0, %v808
    %v810 = vpop.f32.mrb[0].mxu0
    %811 = vdwg.mxu0
    %812 = vrot.lane.b32.xlu0 %v724, 120
    %v813 = vpop.permute.xlu0 %812
    %814 = vrot.lane.b32.xlu0 %v187, 104
    %v815 = vpop.permute.xlu0 %814
    %816 = vrot.lane.b32.xlu0 %v192, 104
    %v817 = vpop.permute.xlu0 %816
    %818 = vrot.lane.b32.xlu0 %v187, 72
    %v819 = vpop.permute.xlu0 %818
    %820 = vrot.lane.b32.xlu0 %v192, 72
    %v821 = vpop.permute.xlu0 %820
    %v822 = vsel %vm201, %v815, 0
    %v824 = vsel %vm201, %v817, 0
    %v826 = vsel %vm201, %v819, 0
    %v828 = vsel %vm201, %v821, 0
    %830 = vmatprep.subr.mxu0 0.0
    %831 = vmatpush1.xpose.msra.mxu0 %v826
    %832 = vmatprep.subr.mxu0 0.0
    %833 = vmatpush1.xpose.msra.mxu0 %v828
    %834 = vmatprep.subr.mxu0 0.0
    %835 = vmatpush1.xpose.msra.mxu0 0.0
    %836 = vmatprep.subr.mxu0 0.0
    %837 = vmatpush1.xpose.msra.mxu0 0.0
    %838 = vmatprep.subr.mxu0 0.0
    %839 = vmatpush1.xpose.msra.mxu0 0.0
    %840 = vmatprep.subr.mxu0 0.0
    %841 = vmatpush1.xpose.msra.mxu0 0.0
    %842 = vmatprep.subr.mxu0 0.0
    %843 = vmatpush1.xpose.msra.mxu0 0.0
    %844 = vmatprep.subr.mxu0 0.0
    %845 = vmatpush1.xpose.msra.mxu0 0.0
    %846 = vmatprep.subr.mxu0 0.0
    %847 = vmatpush1.xpose.msra.mxu0 0.0
    %848 = vmatprep.subr.mxu0 0.0
    %849 = vmatpush1.xpose.msra.mxu0 0.0
    %850 = vmatprep.subr.mxu0 0.0
    %851 = vmatpush1.xpose.msra.mxu0 0.0
    %852 = vmatprep.subr.mxu0 0.0
    %853 = vmatpush1.xpose.msra.mxu0 0.0
    %854 = vmatprep.subr.mxu0 0.0
    %855 = vmatpush1.xpose.msra.mxu0 0.0
    %856 = vmatprep.subr.mxu0 0.0
    %857 = vmatpush1.xpose.msra.mxu0 0.0
    %858 = vmatprep.subr.mxu0 0.0
    %859 = vmatpush1.xpose.msra.mxu0 0.0
    %860 = vmatprep.subr.mxu0 0.0
    %861 = vmatpush1.xpose.msra.mxu0 0.0
    %862 = vmatprep.subr.mxu0 0.0
    %863 = vmatpush1.xpose.msra.mxu0 0.0
    %864 = vmatprep.subr.mxu0 0.0
    %865 = vmatpush1.xpose.msra.mxu0 0.0
    %866 = vmatprep.subr.mxu0 0.0
    %867 = vmatpush1.xpose.msra.mxu0 0.0
    %868 = vmatprep.subr.mxu0 0.0
    %869 = vmatpush1.xpose.msra.mxu0 0.0
    %870 = vmatprep.subr.mxu0 0.0
    %871 = vmatpush1.xpose.msra.mxu0 0.0
    %872 = vmatprep.subr.mxu0 0.0
    %873 = vmatpush1.xpose.msra.mxu0 0.0
    %874 = vmatprep.subr.mxu0 0.0
    %875 = vmatpush1.xpose.msra.mxu0 0.0
    %876 = vmatprep.subr.mxu0 0.0
    %877 = vmatpush1.xpose.msra.mxu0 0.0
    %878 = vmatprep.subr.mxu0 0.0
    %879 = vmatpush1.xpose.msra.mxu0 0.0
    %880 = vmatprep.subr.mxu0 0.0
    %881 = vmatpush1.xpose.msra.mxu0 0.0
    %882 = vmatprep.subr.mxu0 0.0
    %883 = vmatpush1.xpose.msra.mxu0 0.0
    %884 = vmatprep.subr.mxu0 0.0
    %885 = vmatpush1.xpose.msra.mxu0 0.0
    %886 = vmatprep.subr.mxu0 0.0
    %887 = vmatpush1.xpose.msra.mxu0 0.0
    %888 = vmatprep.subr.mxu0 0.0
    %889 = vmatpush1.xpose.msra.mxu0 0.0
    %890 = vmatprep.subr.mxu0 0.0
    %891 = vmatpush1.xpose.msra.mxu0 0.0
    %892 = vmatprep.subr.mxu0 0.0
    %893 = vmatpush1.xpose.msra.mxu0 0.0
    %894 = vmatprep.mubr.f32.mxu0 0.0
    %895 = vmatmul.mubr.f32.gmra.mrb[0].mxu0 %v822
    %v896 = vpop.f32.mrb[0].mxu0
    %v897 = vadd.f32 0.0, %v896
    %v898 = vpop.f32.mrb[0].mxu0
    %899 = vmatprep.mubr.f32.mxu0 0.0
    %900 = vmatmul.mubr.f32.gmra.mrb[0].mxu0 %v824
    %v901 = vpop.f32.mrb[0].mxu0
    %v902 = vadd.f32 0.0, %v901
    %v903 = vpop.f32.mrb[0].mxu0
    %904 = vdwg.mxu0
    %v905 = vmul.f32 %v897, 0.35355338
    %v906 = vmul.f32 %v902, 0.35355338
    %v907 = vadd.f32 %v905, %v100
    %v908 = vadd.f32 %v906, %v101
    %v909 = vsel %vm289, %v907, -inf
    %910 = vmax.xlane.f32.xlu0 %v909
    %v911 = vpop.xlane.xlu0 %910
    %v912 = vsel %vm289, %v908, -inf
    %913 = vmax.xlane.f32.xlu0 %v912
    %v914 = vpop.xlane.xlu0 %913
    %v915 = vsub.f32 %v907, %v911
    %v916 = vsub.f32 %v908, %v914
    %v917 = vmul.f32 %v915, 1.442695
    %v918 = vpow.pop %v917
    %v919 = vmul.f32 %v916, 1.442695
    %v920 = vpow.pop %v919
    %v921 = vsel %vm289, %v918, 0.0
    %922 = vadd.xlane.f32.xlu0 %v921
    %v923 = vpop.xlane.xlu0 %922
    %v924 = vsel %vm289, %v920, 0.0
    %925 = vadd.xlane.f32.xlu0 %v924
    %v926 = vpop.xlane.xlu0 %925
    %v927 = vrcp.pop %v923
    %v928 = vrcp.pop %v926
    %v929 = vmul.f32 %v918, %v927
    %v930 = vmul.f32 %v920, %v928
    %931 = vrot.lane.b32.xlu0 %v187, 40
    %v932 = vpop.permute.xlu0 %931
    %933 = vrot.lane.b32.xlu0 %v192, 40
    %v934 = vpop.permute.xlu0 %933
    %v938 = vsel %vm289, %v929, 0
    %v941 = vsel %vm289, %v930, 0
    %943 = vmatprep.subr.mxu0 0.0
    %944 = vmatpush1.msra.mxu0 %v932
    %945 = vmatprep.subr.mxu0 0.0
    %946 = vmatpush1.msra.mxu0 %v934
    %947 = vmatprep.subr.mxu0 0.0
    %948 = vmatpush1.msra.mxu0 0.0
    %949 = vmatprep.subr.mxu0 0.0
    %950 = vmatpush1.msra.mxu0 0.0
    %951 = vmatprep.subr.mxu0 0.0
    %952 = vmatpush1.msra.mxu0 0.0
    %953 = vmatprep.subr.mxu0 0.0
    %954 = vmatpush1.msra.mxu0 0.0
    %955 = vmatprep.subr.mxu0 0.0
    %956 = vmatpush1.msra.mxu0 0.0
    %957 = vmatprep.subr.mxu0 0.0
    %958 = vmatpush1.msra.mxu0 0.0
    %959 = vmatprep.subr.mxu0 0.0
    %960 = vmatpush1.msra.mxu0 0.0
    %961 = vmatprep.subr.mxu0 0.0
    %962 = vmatpush1.msra.mxu0 0.0
    %963 = vmatprep.subr.mxu0 0.0
    %964 = vmatpush1.msra.mxu0 0.0
    %965 = vmatprep.subr.mxu0 0.0
    %966 = vmatpush1.msra.mxu0 0.0
    %967 = vmatprep.subr.mxu0 0.0
    %968 = vmatpush1.msra.mxu0 0.0
    %969 = vmatprep.subr.mxu0 0.0
    %970 = vmatpush1.msra.mxu0 0.0
    %971 = vmatprep.subr.mxu0 0.0
    %972 = vmatpush1.msra.mxu0 0.0
    %973 = vmatprep.subr.mxu0 0.0
    %974 = vmatpush1.msra.mxu0 0.0
    %975 = vmatprep.subr.mxu0 0.0
    %976 = vmatpush1.msra.mxu0 0.0
    %977 = vmatprep.subr.mxu0 0.0
    %978 = vmatpush1.msra.mxu0 0.0
    %979 = vmatprep.subr.mxu0 0.0
    %980 = vmatpush1.msra.mxu0 0.0
    %981 = vmatprep.subr.mxu0 0.0
    %982 = vmatpush1.msra.mxu0 0.0
    %983 = vmatprep.subr.mxu0 0.0
    %984 = vmatpush1.msra.mxu0 0.0
    %985 = vmatprep.subr.mxu0 0.0
    %986 = vmatpush1.msra.mxu0 0.0
    %987 = vmatprep.subr.mxu0 0.0
    %988 = vmatpush1.msra.mxu0 0.0
    %989 = vmatprep.subr.mxu0 0.0
    %990 = vmatpush1.msra.mxu0 0.0
    %991 = vmatprep.subr.mxu0 0.0
    %992 = vmatpush1.msra.mxu0 0.0
    %993 = vmatprep.subr.mxu0 0.0
    %994 = vmatpush1.msra.mxu0 0.0
    %995 = vmatprep.subr.mxu0 0.0
    %996 = vmatpush1.msra.mxu0 0.0
    %997 = vmatprep.subr.mxu0 0.0
    %998 = vmatpush1.msra.mxu0 0.0
    %999 = vmatprep.subr.mxu0 0.0
    %1000 = vmatpush1.msra.mxu0 0.0
    %1001 = vmatprep.subr.mxu0 0.0
    %1002 = vmatpush1.msra.mxu0 0.0
    %1003 = vmatprep.subr.mxu0 0.0
    %1004 = vmatpush1.msra.mxu0 0.0
    %1005 = vmatprep.subr.mxu0 0.0
    %1006 = vmatpush1.msra.mxu0 0.0
    %1007 = vmatprep.mubr.f32.mxu0 0.0
    %1008 = vmatmul.mubr.f32.gmra.mrb[0].mxu0 %v938
    %v1009 = vpop.f32.mrb[0].mxu0
    %v1010 = vadd.f32 0.0, %v1009
    %v1011 = vpop.f32.mrb[0].mxu0
    %1012 = vmatprep.mubr.f32.mxu0 0.0
    %1013 = vmatmul.mubr.f32.gmra.mrb[0].mxu0 %v941
    %v1014 = vpop.f32.mrb[0].mxu0
    %v1015 = vadd.f32 0.0, %v1014
    %v1016 = vpop.f32.mrb[0].mxu0
    %1017 = vdwg.mxu0
    %1018 = vrot.lane.b32.xlu0 %v930, 120
    %v1019 = vpop.permute.xlu0 %1018
    %1022 = vrot.lane.b32.xlu0 %v598, 8
    %v1023 = vpop.permute.xlu0 %1022
    %1024 = vrot.lane.b32.xlu0 %v603, 8
    %v1025 = vpop.permute.xlu0 %1024
    %1030 = vrot.lane.b32.xlu0 %v804, 16
    %v1031 = vpop.permute.xlu0 %1030
    %1032 = vrot.lane.b32.xlu0 %v809, 16
    %v1033 = vpop.permute.xlu0 %1032
    %1038 = vrot.lane.b32.xlu0 %v1010, 24
    %v1039 = vpop.permute.xlu0 %1038
    %1040 = vrot.lane.b32.xlu0 %v1015, 24
    %v1041 = vpop.permute.xlu0 %1040
    %v1044 = vsel %vm201, %v391, %v1023
    %v1045 = vsel %vm201, %v396, %v1025
    %v1046 = vsel %vm289, %v1044, %v1031
    %v1047 = vsel %vm289, %v1045, %v1033
    %vm1048 = vcmask 195584
    %v1049 = vsel %vm1048, %v1046, %v1039
    %v1050 = vsel %vm1048, %v1047, %v1041
    %v1051 = vld [vmem:[%s4] sm:$0xff]
    %v1052 = vld [vmem:[%s4 + $0x8] sm:$0xff]
    %v1053 = vld [vmem:[%s4 + $0x10] sm:$0xff]
    %v1054 = vld [vmem:[%s4 + $0x18] sm:$0xff]
    %v1055 = vld [vmem:[%s5] sm:$0x1]
    %v1057 = vlaneseq
    %v1058 = vshrl.u32 %v1057, 7
    %v1059 = vsub.s32 0, %v1058
    %v1060 = vrot.slane %v1055, %v1059
    %v1063 = vsel %vm113, %v1049, 0
    %v1066 = vsel %vm113, %v1050, 0
    %1068 = vmatprep.subr.mxu0 0.0
    %1069 = vmatpush1.msra.mxu0 %v1051
    %1070 = vmatprep.subr.mxu0 0.0
    %1071 = vmatpush1.msra.mxu0 %v1052
    %1072 = vmatprep.subr.mxu0 0.0
    %1073 = vmatpush1.msra.mxu0 %v1053
    %1074 = vmatprep.subr.mxu0 0.0
    %1075 = vmatpush1.msra.mxu0 %v1054
    %1076 = vmatprep.subr.mxu0 0.0
    %1077 = vmatpush1.msra.mxu0 0.0
    %1078 = vmatprep.subr.mxu0 0.0
    %1079 = vmatpush1.msra.mxu0 0.0
    %1080 = vmatprep.subr.mxu0 0.0
    %1081 = vmatpush1.msra.mxu0 0.0
    %1082 = vmatprep.subr.mxu0 0.0
    %1083 = vmatpush1.msra.mxu0 0.0
    %1084 = vmatprep.subr.mxu0 0.0
    %1085 = vmatpush1.msra.mxu0 0.0
    %1086 = vmatprep.subr.mxu0 0.0
    %1087 = vmatpush1.msra.mxu0 0.0
    %1088 = vmatprep.subr.mxu0 0.0
    %1089 = vmatpush1.msra.mxu0 0.0
    %1090 = vmatprep.subr.mxu0 0.0
    %1091 = vmatpush1.msra.mxu0 0.0
    %1092 = vmatprep.subr.mxu0 0.0
    %1093 = vmatpush1.msra.mxu0 0.0
    %1094 = vmatprep.subr.mxu0 0.0
    %1095 = vmatpush1.msra.mxu0 0.0
    %1096 = vmatprep.subr.mxu0 0.0
    %1097 = vmatpush1.msra.mxu0 0.0
    %1098 = vmatprep.subr.mxu0 0.0
    %1099 = vmatpush1.msra.mxu0 0.0
    %1100 = vmatprep.subr.mxu0 0.0
    %1101 = vmatpush1.msra.mxu0 0.0
    %1102 = vmatprep.subr.mxu0 0.0
    %1103 = vmatpush1.msra.mxu0 0.0
    %1104 = vmatprep.subr.mxu0 0.0
    %1105 = vmatpush1.msra.mxu0 0.0
    %1106 = vmatprep.subr.mxu0 0.0
    %1107 = vmatpush1.msra.mxu0 0.0
    %1108 = vmatprep.subr.mxu0 0.0
    %1109 = vmatpush1.msra.mxu0 0.0
    %1110 = vmatprep.subr.mxu0 0.0
    %1111 = vmatpush1.msra.mxu0 0.0
    %1112 = vmatprep.subr.mxu0 0.0
    %1113 = vmatpush1.msra.mxu0 0.0
    %1114 = vmatprep.subr.mxu0 0.0
    %1115 = vmatpush1.msra.mxu0 0.0
    %1116 = vmatprep.subr.mxu0 0.0
    %1117 = vmatpush1.msra.mxu0 0.0
    %1118 = vmatprep.subr.mxu0 0.0
    %1119 = vmatpush1.msra.mxu0 0.0
    %1120 = vmatprep.subr.mxu0 0.0
    %1121 = vmatpush1.msra.mxu0 0.0
    %1122 = vmatprep.subr.mxu0 0.0
    %1123 = vmatpush1.msra.mxu0 0.0
    %1124 = vmatprep.subr.mxu0 0.0
    %1125 = vmatpush1.msra.mxu0 0.0
    %1126 = vmatprep.subr.mxu0 0.0
    %1127 = vmatpush1.msra.mxu0 0.0
    %1128 = vmatprep.subr.mxu0 0.0
    %1129 = vmatpush1.msra.mxu0 0.0
    %1130 = vmatprep.subr.mxu0 0.0
    %1131 = vmatpush1.msra.mxu0 0.0
    %1132 = vmatprep.mubr.f32.mxu0 0.0
    %1133 = vmatmul.mubr.f32.gmra.mrb[0].mxu0 %v1063
    %v1134 = vpop.f32.mrb[0].mxu0
    %v1135 = vadd.f32 %v1060, %v1134
    %v1136 = vpop.f32.mrb[0].mxu0
    %1137 = vmatprep.mubr.f32.mxu0 0.0
    %1138 = vmatmul.mubr.f32.gmra.mrb[0].mxu0 %v1066
    %v1139 = vpop.f32.mrb[0].mxu0
    %v1140 = vadd.f32 %v1060, %v1139
    %v1141 = vpop.f32.mrb[0].mxu0
    %1142 = vdwg.mxu0
    %v1143 = vadd.f32 %v98, %v1135
    %v1144 = vadd.f32 %v99, %v1140
    %v1145 = vld [vmem:[%s6] sm:$0x1]
    %v1146 = vld [vmem:[%s7] sm:$0x1]
    %v1147 = vsel %vm113, %v1143, 0.0
    %1148 = vadd.xlane.f32.xlu0 %v1147
    %v1149 = vpop.xlane.xlu0 %1148
    %v1150 = vsel %vm113, %v1144, 0.0
    %1151 = vadd.xlane.f32.xlu0 %v1150
    %v1152 = vpop.xlane.xlu0 %1151
    %v1153 = vrcp.pop 32.0
    %v1154 = vmul.f32 %v1149, %v1153
    %v1155 = vmul.f32 %v1152, %v1153
    %v1156 = vsub.f32 %v1143, %v1154
    %v1157 = vsub.f32 %v1144, %v1155
    %v1158 = vmul.f32 %v1156, %v1156
    %v1159 = vmul.f32 %v1157, %v1157
    %v1160 = vsel %vm113, %v1158, 0.0
    %1161 = vadd.xlane.f32.xlu0 %v1160
    %v1162 = vpop.xlane.xlu0 %1161
    %v1163 = vsel %vm113, %v1159, 0.0
    %1164 = vadd.xlane.f32.xlu0 %v1163
    %v1165 = vpop.xlane.xlu0 %1164
    %v1166 = vmul.f32 %v1162, %v1153
    %v1167 = vmul.f32 %v1165, %v1153
    %v1168 = vadd.f32 %v1166, 1e-05
    %v1169 = vadd.f32 %v1167, 1e-05
    %v1170 = vrsqrt.pop %v1168
    %v1171 = vrsqrt.pop %v1169
    %v1172 = vmul.f32 %v1156, %v1170
    %v1173 = vmul.f32 %v1157, %v1171
    %v1175 = vlaneseq
    %v1176 = vshrl.u32 %v1175, 7
    %v1177 = vsub.s32 0, %v1176
    %v1178 = vrot.slane %v1145, %v1177
    %v1180 = vmul.f32 %v1172, %v1178
    %v1181 = vmul.f32 %v1173, %v1178
    %v1183 = vlaneseq
    %v1184 = vshrl.u32 %v1183, 7
    %v1185 = vsub.s32 0, %v1184
    %v1186 = vrot.slane %v1146, %v1185
    %v1188 = vadd.f32 %v1180, %v1186
    %v1189 = vadd.f32 %v1181, %v1186
    %v1190 = vld [vmem:[%s8] sm:$0xff]
    %v1191 = vld [vmem:[%s8 + $0x8] sm:$0xff]
    %v1192 = vld [vmem:[%s8 + $0x10] sm:$0xff]
    %v1193 = vld [vmem:[%s8 + $0x18] sm:$0xff]
    %v1194 = vld [vmem:[%s9] sm:$0x1]
    %v1196 = vlaneseq
    %v1197 = vshrl.u32 %v1196, 7
    %v1198 = vsub.s32 0, %v1197
    %v1199 = vrot.slane %v1194, %v1198
    %v1202 = vsel %vm113, %v1188, 0
    %v1205 = vsel %vm113, %v1189, 0
    %1207 = vmatprep.subr.mxu0 0.0
    %1208 = vmatpush1.msra.mxu0 %v1190
    %1209 = vmatprep.subr.mxu0 0.0
    %1210 = vmatpush1.msra.mxu0 %v1191
    %1211 = vmatprep.subr.mxu0 0.0
    %1212 = vmatpush1.msra.mxu0 %v1192
    %1213 = vmatprep.subr.mxu0 0.0
    %1214 = vmatpush1.msra.mxu0 %v1193
    %1215 = vmatprep.subr.mxu0 0.0
    %1216 = vmatpush1.msra.mxu0 0.0
    %1217 = vmatprep.subr.mxu0 0.0
    %1218 = vmatpush1.msra.mxu0 0.0
    %1219 = vmatprep.subr.mxu0 0.0
    %1220 = vmatpush1.msra.mxu0 0.0
    %1221 = vmatprep.subr.mxu0 0.0
    %1222 = vmatpush1.msra.mxu0 0.0
    %1223 = vmatprep.subr.mxu0 0.0
    %1224 = vmatpush1.msra.mxu0 0.0
    %1225 = vmatprep.subr.mxu0 0.0
    %1226 = vmatpush1.msra.mxu0 0.0
    %1227 = vmatprep.subr.mxu0 0.0
    %1228 = vmatpush1.msra.mxu0 0.0
    %1229 = vmatprep.subr.mxu0 0.0
    %1230 = vmatpush1.msra.mxu0 0.0
    %1231 = vmatprep.subr.mxu0 0.0
    %1232 = vmatpush1.msra.mxu0 0.0
    %1233 = vmatprep.subr.mxu0 0.0
    %1234 = vmatpush1.msra.mxu0 0.0
    %1235 = vmatprep.subr.mxu0 0.0
    %1236 = vmatpush1.msra.mxu0 0.0
    %1237 = vmatprep.subr.mxu0 0.0
    %1238 = vmatpush1.msra.mxu0 0.0
    %1239 = vmatprep.subr.mxu0 0.0
    %1240 = vmatpush1.msra.mxu0 0.0
    %1241 = vmatprep.subr.mxu0 0.0
    %1242 = vmatpush1.msra.mxu0 0.0
    %1243 = vmatprep.subr.mxu0 0.0
    %1244 = vmatpush1.msra.mxu0 0.0
    %1245 = vmatprep.subr.mxu0 0.0
    %1246 = vmatpush1.msra.mxu0 0.0
    %1247 = vmatprep.subr.mxu0 0.0
    %1248 = vmatpush1.msra.mxu0 0.0
    %1249 = vmatprep.subr.mxu0 0.0
    %1250 = vmatpush1.msra.mxu0 0.0
    %1251 = vmatprep.subr.mxu0 0.0
    %1252 = vmatpush1.msra.mxu0 0.0
    %1253 = vmatprep.subr.mxu0 0.0
    %1254 = vmatpush1.msra.mxu0 0.0
    %1255 = vmatprep.subr.mxu0 0.0
    %1256 = vmatpush1.msra.mxu0 0.0
    %1257 = vmatprep.subr.mxu0 0.0
    %1258 = vmatpush1.msra.mxu0 0.0
    %1259 = vmatprep.subr.mxu0 0.0
    %1260 = vmatpush1.msra.mxu0 0.0
    %1261 = vmatprep.subr.mxu0 0.0
    %1262 = vmatpush1.msra.mxu0 0.0
    %1263 = vmatprep.subr.mxu0 0.0
    %1264 = vmatpush1.msra.mxu0 0.0
    %1265 = vmatprep.subr.mxu0 0.0
    %1266 = vmatpush1.msra.mxu0 0.0
    %1267 = vmatprep.subr.mxu0 0.0
    %1268 = vmatpush1.msra.mxu0 0.0
    %1269 = vmatprep.subr.mxu0 0.0
    %1270 = vmatpush1.msra.mxu0 0.0
    %1271 = vmatprep.mubr.f32.mxu0 0.0
    %1272 = vmatmul.mubr.f32.gmra.mrb[0].mxu0 %v1202
    %v1273 = vpop.f32.mrb[0].mxu0
    %v1274 = vadd.f32 %v1199, %v1273
    %v1275 = vpop.f32.mrb[0].mxu0
    %1276 = vmatprep.mubr.f32.mxu0 0.0
    %1277 = vmatmul.mubr.f32.gmra.mrb[0].mxu0 %v1205
    %v1278 = vpop.f32.mrb[0].mxu0
    %v1279 = vadd.f32 %v1199, %v1278
    %v1280 = vpop.f32.mrb[0].mxu0
    %1281 = vdwg.mxu0
    %v1282 = vmax.f32 %v1274, 0.0
    %v1283 = vmax.f32 %v1279, 0.0
    %v1284 = vld [vmem:[%s10] sm:$0xff]
    %v1285 = vld [vmem:[%s10 + $0x8] sm:$0xff]
    %v1286 = vld [vmem:[%s10 + $0x10] sm:$0xff]
    %v1287 = vld [vmem:[%s10 + $0x18] sm:$0xff]
    %v1288 = vld [vmem:[%s10 + $0x20] sm:$0xff]
    %v1289 = vld [vmem:[%s10 + $0x28] sm:$0xff]
    %v1290 = vld [vmem:[%s10 + $0x30] sm:$0xff]
    %v1291 = vld [vmem:[%s10 + $0x38] sm:$0xff]
    %v1292 = vld [vmem:[%s11] sm:$0x1]
    %v1294 = vlaneseq
    %v1295 = vshrl.u32 %v1294, 7
    %v1296 = vsub.s32 0, %v1295
    %v1297 = vrot.slane %v1292, %v1296
    %vm1299 = vcmask 523264
    %v1301 = vsel %vm1299, %v1282, 0
    %v1304 = vsel %vm1299, %v1283, 0
    %1306 = vmatprep.subr.mxu0 0.0
    %1307 = vmatpush1.msra.mxu0 %v1284
    %1308 = vmatprep.subr.mxu0 0.0
    %1309 = vmatpush1.msra.mxu0 %v1285
    %1310 = vmatprep.subr.mxu0 0.0
    %1311 = vmatpush1.msra.mxu0 %v1286
    %1312 = vmatprep.subr.mxu0 0.0
    %1313 = vmatpush1.msra.mxu0 %v1287
    %1314 = vmatprep.subr.mxu0 0.0
    %1315 = vmatpush1.msra.mxu0 %v1288
    %1316 = vmatprep.subr.mxu0 0.0
    %1317 = vmatpush1.msra.mxu0 %v1289
    %1318 = vmatprep.subr.mxu0 0.0
    %1319 = vmatpush1.msra.mxu0 %v1290
    %1320 = vmatprep.subr.mxu0 0.0
    %1321 = vmatpush1.msra.mxu0 %v1291
    %1322 = vmatprep.subr.mxu0 0.0
    %1323 = vmatpush1.msra.mxu0 0.0
    %1324 = vmatprep.subr.mxu0 0.0
    %1325 = vmatpush1.msra.mxu0 0.0
    %1326 = vmatprep.subr.mxu0 0.0
    %1327 = vmatpush1.msra.mxu0 0.0
    %1328 = vmatprep.subr.mxu0 0.0
    %1329 = vmatpush1.msra.mxu0 0.0
    %1330 = vmatprep.subr.mxu0 0.0
    %1331 = vmatpush1.msra.mxu0 0.0
    %1332 = vmatprep.subr.mxu0 0.0
    %1333 = vmatpush1.msra.mxu0 0.0
    %1334 = vmatprep.subr.mxu0 0.0
    %1335 = vmatpush1.msra.mxu0 0.0
    %1336 = vmatprep.subr.mxu0 0.0
    %1337 = vmatpush1.msra.mxu0 0.0
    %1338 = vmatprep.subr.mxu0 0.0
    %1339 = vmatpush1.msra.mxu0 0.0
    %1340 = vmatprep.subr.mxu0 0.0
    %1341 = vmatpush1.msra.mxu0 0.0
    %1342 = vmatprep.subr.mxu0 0.0
    %1343 = vmatpush1.msra.mxu0 0.0
    %1344 = vmatprep.subr.mxu0 0.0
    %1345 = vmatpush1.msra.mxu0 0.0
    %1346 = vmatprep.subr.mxu0 0.0
    %1347 = vmatpush1.msra.mxu0 0.0
    %1348 = vmatprep.subr.mxu0 0.0
    %1349 = vmatpush1.msra.mxu0 0.0
    %1350 = vmatprep.subr.mxu0 0.0
    %1351 = vmatpush1.msra.mxu0 0.0
    %1352 = vmatprep.subr.mxu0 0.0
    %1353 = vmatpush1.msra.mxu0 0.0
    %1354 = vmatprep.subr.mxu0 0.0
    %1355 = vmatpush1.msra.mxu0 0.0
    %1356 = vmatprep.subr.mxu0 0.0
    %1357 = vmatpush1.msra.mxu0 0.0
    %1358 = vmatprep.subr.mxu0 0.0
    %1359 = vmatpush1.msra.mxu0 0.0
    %1360 = vmatprep.subr.mxu0 0.0
    %1361 = vmatpush1.msra.mxu0 0.0
    %1362 = vmatprep.subr.mxu0 0.0
    %1363 = vmatpush1.msra.mxu0 0.0
    %1364 = vmatprep.subr.mxu0 0.0
    %1365 = vmatpush1.msra.mxu0 0.0
    %1366 = vmatprep.subr.mxu0 0.0
    %1367 = vmatpush1.msra.mxu0 0.0
    %1368 = vmatprep.subr.mxu0 0.0
    %1369 = vmatpush1.msra.mxu0 0.0
    %1370 = vmatprep.mubr.f32.mxu0 0.0
    %1371 = vmatmul.mubr.f32.gmra.mrb[0].mxu0 %v1301
    %v1372 = vpop.f32.mrb[0].mxu0
    %v1373 = vadd.f32 %v1297, %v1372
    %v1374 = vpop.f32.mrb[0].mxu0
    %1375 = vmatprep.mubr.f32.mxu0 0.0
    %1376 = vmatmul.mubr.f32.gmra.mrb[0].mxu0 %v1304
    %v1377 = vpop.f32.mrb[0].mxu0
    %v1378 = vadd.f32 %v1297, %v1377
    %v1379 = vpop.f32.mrb[0].mxu0
    %1380 = vdwg.mxu0
    %v1381 = vadd.f32 %v1188, %v1373
    %v1382 = vadd.f32 %v1189, %v1378
    %v1383 = vld [vmem:[%s12] sm:$0x1]
    %v1384 = vld [vmem:[%s13] sm:$0x1]
    %v1385 = vsel %vm113, %v1381, 0.0
    %1386 = vadd.xlane.f32.xlu0 %v1385
    %v1387 = vpop.xlane.xlu0 %1386
    %v1388 = vsel %vm113, %v1382, 0.0
    %1389 = vadd.xlane.f32.xlu0 %v1388
    %v1390 = vpop.xlane.xlu0 %1389
    %v1391 = vmul.f32 %v1387, %v1153
    %v1392 = vmul.f32 %v1390, %v1153
    %v1393 = vsub.f32 %v1381, %v1391
    %v1394 = vsub.f32 %v1382, %v1392
    %v1395 = vmul.f32 %v1393, %v1393
    %v1396 = vmul.f32 %v1394, %v1394
    %v1397 = vsel %vm113, %v1395, 0.0
    %1398 = vadd.xlane.f32.xlu0 %v1397
    %v1399 = vpop.xlane.xlu0 %1398
    %v1400 = vsel %vm113, %v1396, 0.0
    %1401 = vadd.xlane.f32.xlu0 %v1400
    %v1402 = vpop.xlane.xlu0 %1401
    %v1403 = vmul.f32 %v1399, %v1153
    %v1404 = vmul.f32 %v1402, %v1153
    %v1405 = vadd.f32 %v1403, 1e-05
    %v1406 = vadd.f32 %v1404, 1e-05
    %v1407 = vrsqrt.pop %v1405
    %v1408 = vrsqrt.pop %v1406
    %v1409 = vmul.f32 %v1393, %v1407
    %v1410 = vmul.f32 %v1394, %v1408
    %v1412 = vlaneseq
    %v1413 = vshrl.u32 %v1412, 7
    %v1414 = vsub.s32 0, %v1413
    %v1415 = vrot.slane %v1383, %v1414
    %v1417 = vmul.f32 %v1409, %v1415
    %v1418 = vmul.f32 %v1410, %v1415
    %v1420 = vlaneseq
    %v1421 = vshrl.u32 %v1420, 7
    %v1422 = vsub.s32 0, %v1421
    %v1423 = vrot.slane %v1384, %v1422
    %v1425 = vadd.f32 %v1417, %v1423
    %v1426 = vadd.f32 %v1418, %v1423
    %v1427 = vld [vmem:[#allocation7] sm:$0xff]
    %v1428 = vld [vmem:[#allocation7 + $0x8] sm:$0xff]
    %v1429 = vld [vmem:[#allocation7 + $0x10] sm:$0xff]
    %v1430 = vld [vmem:[#allocation7 + $0x18] sm:$0xff]
    %v1431 = vld [vmem:[%s15] sm:$0x1]
    %v1433 = vlaneseq
    %v1434 = vshrl.u32 %v1433, 7
    %v1435 = vsub.s32 0, %v1434
    %v1436 = vrot.slane %v1431, %v1435
    %v1439 = vsel %vm113, %v1425, 0
    %v1442 = vsel %vm113, %v1426, 0
    %1444 = vmatprep.subr.mxu0 0.0
    %1445 = vmatpush1.msra.mxu0 %v1427
    %1446 = vmatprep.subr.mxu0 0.0
    %1447 = vmatpush1.msra.mxu0 %v1428
    %1448 = vmatprep.subr.mxu0 0.0
    %1449 = vmatpush1.msra.mxu0 %v1429
    %1450 = vmatprep.subr.mxu0 0.0
    %1451 = vmatpush1.msra.mxu0 %v1430
    %1452 = vmatprep.subr.mxu0 0.0
    %1453 = vmatpush1.msra.mxu0 0.0
    %1454 = vmatprep.subr.mxu0 0.0
    %1455 = vmatpush1.msra.mxu0 0.0
    %1456 = vmatprep.subr.mxu0 0.0
    %1457 = vmatpush1.msra.mxu0 0.0
    %1458 = vmatprep.subr.mxu0 0.0
    %1459 = vmatpush1.msra.mxu0 0.0
    %1460 = vmatprep.subr.mxu0 0.0
    %1461 = vmatpush1.msra.mxu0 0.0
    %1462 = vmatprep.subr.mxu0 0.0
    %1463 = vmatpush1.msra.mxu0 0.0
    %1464 = vmatprep.subr.mxu0 0.0
    %1465 = vmatpush1.msra.mxu0 0.0
    %1466 = vmatprep.subr.mxu0 0.0
    %1467 = vmatpush1.msra.mxu0 0.0
    %1468 = vmatprep.subr.mxu0 0.0
    %1469 = vmatpush1.msra.mxu0 0.0
    %1470 = vmatprep.subr.mxu0 0.0
    %1471 = vmatpush1.msra.mxu0 0.0
    %1472 = vmatprep.subr.mxu0 0.0
    %1473 = vmatpush1.msra.mxu0 0.0
    %1474 = vmatprep.subr.mxu0 0.0
    %1475 = vmatpush1.msra.mxu0 0.0
    %1476 = vmatprep.subr.mxu0 0.0
    %1477 = vmatpush1.msra.mxu0 0.0
    %1478 = vmatprep.subr.mxu0 0.0
    %1479 = vmatpush1.msra.mxu0 0.0
    %1480 = vmatprep.subr.mxu0 0.0
    %1481 = vmatpush1.msra.mxu0 0.0
    %1482 = vmatprep.subr.mxu0 0.0
    %1483 = vmatpush1.msra.mxu0 0.0
    %1484 = vmatprep.subr.mxu0 0.0
    %1485 = vmatpush1.msra.mxu0 0.0
    %1486 = vmatprep.subr.mxu0 0.0
    %1487 = vmatpush1.msra.mxu0 0.0
    %1488 = vmatprep.subr.mxu0 0.0
    %1489 = vmatpush1.msra.mxu0 0.0
    %1490 = vmatprep.subr.mxu0 0.0
    %1491 = vmatpush1.msra.mxu0 0.0
    %1492 = vmatprep.subr.mxu0 0.0
    %1493 = vmatpush1.msra.mxu0 0.0
    %1494 = vmatprep.subr.mxu0 0.0
    %1495 = vmatpush1.msra.mxu0 0.0
    %1496 = vmatprep.subr.mxu0 0.0
    %1497 = vmatpush1.msra.mxu0 0.0
    %1498 = vmatprep.subr.mxu0 0.0
    %1499 = vmatpush1.msra.mxu0 0.0
    %1500 = vmatprep.subr.mxu0 0.0
    %1501 = vmatpush1.msra.mxu0 0.0
    %1502 = vmatprep.subr.mxu0 0.0
    %1503 = vmatpush1.msra.mxu0 0.0
    %1504 = vmatprep.subr.mxu0 0.0
    %1505 = vmatpush1.msra.mxu0 0.0
    %1506 = vmatprep.subr.mxu0 0.0
    %1507 = vmatpush1.msra.mxu0 0.0
    %1508 = vmatprep.mubr.f32.mxu0 0.0
    %1509 = vmatmul.mubr.f32.gmra.mrb[0].mxu0 %v1439
    %v1510 = vpop.f32.mrb[0].mxu0
    %v1511 = vadd.f32 %v1436, %v1510
    %v1512 = vpop.f32.mrb[0].mxu0
    %1513 = vmatprep.mubr.f32.mxu0 0.0
    %1514 = vmatmul.mubr.f32.gmra.mrb[0].mxu0 %v1442
    %v1515 = vpop.f32.mrb[0].mxu0
    %v1516 = vadd.f32 %v1436, %v1515
    %v1517 = vpop.f32.mrb[0].mxu0
    %1518 = vdwg.mxu0
    %1519 = vst [vmem:[#allocation8] sm:$0xff] %v1511
    %1520 = vst [vmem:[#allocation8 + $0x8] sm:$0xff] %v1516
    %1521 = vrot.lane.b32.xlu0 %v517, 8
    %v1522 = vpop.permute.xlu0 %1521
    %1523 = vrot.lane.b32.xlu0 %v607, 8
    %v1524 = vpop.permute.xlu0 %1523
    %1527 = vrot.lane.b32.xlu0 %v723, 16
    %v1528 = vpop.permute.xlu0 %1527
    %1529 = vrot.lane.b32.xlu0 %v813, 16
    %v1530 = vpop.permute.xlu0 %1529
    %1533 = vrot.lane.b32.xlu0 %v929, 24
    %v1534 = vpop.permute.xlu0 %1533
    %1535 = vrot.lane.b32.xlu0 %v1019, 24
    %v1536 = vpop.permute.xlu0 %1535
    %v1539 = vsel %vm201, %v310, %v1522
    %v1540 = vsel %vm201, %v400, %v1524
    %v1541 = vsel %vm289, %v1539, %v1528
    %v1542 = vsel %vm289, %v1540, %v1530
    %v1543 = vsel %vm1048, %v1541, %v1534
    %v1544 = vsel %vm1048, %v1542, %v1536
    %1545 = vst.msk [vmem:[#allocation9] sm:$0xff] %vm113, %v1543
    %1546 = vst.msk [vmem:[#allocation9 + $0x8] sm:$0xff] %vm113, %v1544
    // Predicated region
    $region78: #{tpu_custom_call.1} parent=1 // pred_check
      _
    $region79: #{tpu_custom_call.1} parent=1 // pred_check_branch
      %1548 = sbr.rel (0) target = $region81
    $region80: #{tpu_custom_call.1} parent=1 // pred_region
      %s1550 = ssub.s32 256, 256
      %1551 = vsyncadd [#allocation4], %s1550
      %s1552 = sshll.u32 [#allocation8], 4
      %s1553 = int_to_ptr.vmem [resolvable:$true] %s1552
      %1558 = dma.vmem_to_hbm [thread:$0]  %s1553, 256, %s16, [#allocation4], 128, 128, 8
    $region81: #{tpu_custom_call.1} parent=1 // pred_fallthru
      _
    // Predicated region
    $region82: #{tpu_custom_call.1} parent=1 // pred_check
      _
    $region83: #{tpu_custom_call.1} parent=1 // pred_check_branch
      %1560 = sbr.rel (0) target = $region85
    $region84: #{tpu_custom_call.1} parent=1 // pred_region
      %s1562 = ssub.s32 256, 256
      %1563 = vsyncadd [#allocation10], %s1562
      %s1564 = sshll.u32 [#allocation9], 4
      %s1565 = int_to_ptr.vmem [resolvable:$true] %s1564
      %1570 = dma.vmem_to_hbm [thread:$0]  %s1565, 256, %s17, [#allocation10], 128, 128, 8
    $region85: #{tpu_custom_call.1} parent=1 // pred_fallthru
      _
    // Predicated region
    $region86: #{tpu_custom_call.1} parent=1 // pred_check
      _
    $region87: #{tpu_custom_call.1} parent=1 // pred_check_branch
      %1572 = sbr.rel (0) target = $region89
    $region88: #{tpu_custom_call.1} parent=1 // pred_region
      %1573 = dma.done [#allocation4], 256
    $region89: #{tpu_custom_call.1} parent=1 // pred_fallthru
      _
    // Predicated region
    $region90: #{tpu_custom_call.1} parent=1 // pred_check
      _
    $region91: #{tpu_custom_call.1} parent=1 // pred_check_branch
      %1575 = sbr.rel (0) target = $region93
    $region92: #{tpu_custom_call.1} parent=1 // pred_region
      %1576 = dma.done [#allocation10], 256
    $region93: #{tpu_custom_call.1} parent=1 // pred_fallthru
      _
    %1577 = vsyncpa [#allocation3], 1
    %1578 = vsyncpa [#allocation6], 1
    %1579 = vsyncpa [#allocation4], 1
    %1580 = vsyncpa [#allocation10], 1

</llo_original>
